<compile_context>
chip_gen: v5e
topology: v5e:2x2
jax: 0.10.0
libtpu: 0.0.40
codegen_flags: <defaults>
</compile_context>

<pallas_src>
import functools

import jax
import jax.numpy as jnp
from jax.experimental import pallas as pl
from jax.experimental.pallas import tpu as pltpu

N_HEADS = 4
LN_EPS = 1e-5                 # nn.LayerNorm default eps
MASK_NEG = -1e30              # additive value for blocked edges (finite! see above)


# ---------------------------------------------------------------------------
# Generation-aware knobs
# ---------------------------------------------------------------------------
def _tpu_generation():
    try:
        kind = jax.devices()[0].device_kind.lower()
    except Exception:
        return 0
    for g in (7, 6, 5, 4, 3, 2):
        if str(g) in kind:
            return g
    return 0


def _vmem_limit_bytes(gen):
    # v7x: 64 MiB VMEM per TensorCore -> keep 48 MiB headroom.
    # v5e / v6e: 128 MiB -> allow larger tiles / deeper pipelining.
    if gen in (5, 6):
        return 96 * 1024 * 1024
    return 48 * 1024 * 1024


def _exp_dtype(gen):
    # v6e/v7x have bf16 EUP/VPU: bf16 exp ~doubles throughput of the EUP-bound
    # inner loop.  v5e and older: keep f32.
    return jnp.bfloat16 if gen >= 6 else jnp.float32


# ---------------------------------------------------------------------------
# Kernel 1: fused QKV projection (one wide MXU matmul per row tile), emitting
# q/k/v directly head-major (H, N, dh) so no transpose is needed downstream.
# ---------------------------------------------------------------------------
def qkv_proj_kernel(x_ref, wqkv_ref, bqkv_ref, q_ref, k_ref, v_ref):
    H, _, dh = q_ref.shape
    D = H * dh
    # One (tile, D) x (D, 3D) bf16 matmul with f32 accumulation.
    # 1/sqrt(dh) is already folded into the Q columns of wqkv/bqkv (host side).
    qkv = jnp.dot(x_ref[...].astype(jnp.bfloat16), wqkv_ref[...],
                  preferred_element_type=jnp.float32) + bqkv_ref[...]
    qkv = qkv.astype(jnp.bfloat16)
    for h in range(H):                      # static unroll, H small
        q_ref[h] = qkv[:, h * dh:(h + 1) * dh]
        k_ref[h] = qkv[:, D + h * dh:D + (h + 1) * dh]
        v_ref[h] = qkv[:, 2 * D + h * dh:2 * D + (h + 1) * dh]


# ---------------------------------------------------------------------------
# Kernel 2: flash attention (online softmax over KV tiles, heads batched) +
#           output projection + residual/LN1 + FFN + residual/LN2.
# Grid: (query tiles [parallel], KV tiles [arbitrary / reduction]).
# occ_ref: scalar-prefetched per-(i,j) tile occupancy (skip empty KV tiles).
# ---------------------------------------------------------------------------
def flash_gt_kernel(occ_ref, x_ref, q_ref, k_ref, v_ref, mask_ref,
                    woh_ref, bo_ref, ln1g_ref, ln1b_ref,
                    w1_ref, b1_ref, w2_ref, b2_ref,
                    ln2g_ref, ln2b_ref,
                    out_ref,
                    m_sc, l_sc, acc_sc, *, exp_dtype):
    i = pl.program_id(0)
    j = pl.program_id(1)
    nk = pl.num_programs(1)

    @pl.when(j == 0)
    def _init():
        m_sc[...] = jnp.full(m_sc.shape, -jnp.inf, m_sc.dtype)
        l_sc[...] = jnp.zeros(l_sc.shape, l_sc.dtype)
        acc_sc[...] = jnp.zeros(acc_sc.shape, acc_sc.dtype)

    # ---- one KV tile (skipped entirely if no edges fall into it) -----------
    @pl.when(occ_ref[i * nk + j] != 0)
    def _step():
        # q/k/v tiles are (H, T, dh) bf16; scores accumulate in f32 on the MXU.
        s = jnp.einsum('hqd,hkd->hqk', q_ref[...], k_ref[...],
                       preferred_element_type=jnp.float32)           # (H,TQ,TK)
        keep = mask_ref[...] != 0                                     # int8 -> bool
        s = jnp.where(keep[None, :, :], s, MASK_NEG)

        m_prev = m_sc[...]
        m_new = jnp.maximum(m_prev, jnp.max(s, axis=-1, keepdims=True))
        alpha = jnp.exp(m_prev - m_new)
        # exp in bf16 on v6e/v7x (EUP-bound loop), f32 elsewhere.
        p = jnp.exp((s - m_new).astype(exp_dtype))                    # (H,TQ,TK)
        l_sc[...] = alpha * l_sc[...] + jnp.sum(
            p.astype(jnp.float32), axis=-1, keepdims=True)
        acc_sc[...] = alpha * acc_sc[...] + jnp.einsum(
            'hqk,hkd->hqd', p.astype(jnp.bfloat16), v_ref[...],
            preferred_element_type=jnp.float32)
        m_sc[...] = m_new

    # ---- after the last KV tile: finish the layer for this query tile ------
    @pl.when(j == nk - 1)
    def _finalize():
        # Exact normalization (outside the hot loop); guard against rows whose
        # KV tiles were all skipped (degenerate, can't happen with self-loops).
        o = acc_sc[...] / jnp.maximum(l_sc[...], 1e-30)               # (H,TQ,dh)

        # Output projection with head-split weight (H, dh, D): merging heads is
        # a batched matmul + leading-axis sum (no lane slicing / concat).
        attn = jnp.einsum('hqc,hcf->hqf', o.astype(jnp.bfloat16), woh_ref[...],
                          preferred_element_type=jnp.float32)         # (H,TQ,D)
        attn = jnp.sum(attn, axis=0) + bo_ref[...]                    # (TQ, D)
        # attention dropout: identity in eval mode.

        # residual + LayerNorm1 (f32)
        h = x_ref[...] + attn
        mu = jnp.mean(h, axis=-1, keepdims=True)
        var = jnp.mean(jnp.square(h - mu), axis=-1, keepdims=True)
        h = (h - mu) * jax.lax.rsqrt(var + LN_EPS) * ln1g_ref[...] + ln1b_ref[...]

        # FFN (bf16 MXU matmuls, f32 accumulation), ReLU
        h_in2 = h
        f = jnp.dot(h.astype(jnp.bfloat16), w1_ref[...],
                    preferred_element_type=jnp.float32) + b1_ref[...]
        f = jnp.maximum(f, 0.0)
        f = jnp.dot(f.astype(jnp.bfloat16), w2_ref[...],
                    preferred_element_type=jnp.float32) + b2_ref[...]
        # dropout: identity in eval mode.

        # residual + LayerNorm2
        h = h_in2 + f
        mu2 = jnp.mean(h, axis=-1, keepdims=True)
        var2 = jnp.mean(jnp.square(h - mu2), axis=-1, keepdims=True)
        h = (h - mu2) * jax.lax.rsqrt(var2 + LN_EPS) * ln2g_ref[...] + ln2b_ref[...]

        out_ref[...] = h.astype(out_ref.dtype)


# ---------------------------------------------------------------------------
# Wrapper
# ---------------------------------------------------------------------------
def graph_transformer_layer(x, keep_mask, params, *,
                            tile_q=256, tile_kv=512, tile_proj=512):
    """x: (N, D) f32 node features; keep_mask: (N, N) int8 (1=attend, 0=blocked)."""
    (wqkv, bqkv, woh, bo, ln1g, ln1b, w1, b1, w2, b2, ln2g, ln2b) = params
    N, D = x.shape
    H = N_HEADS
    dh = D // H
    F = w1.shape[-1]
    assert D % H == 0

    gen = _tpu_generation()
    vmem_limit = _vmem_limit_bytes(gen)
    exp_dtype = _exp_dtype(gen)

    tm = min(tile_proj, N)
    tq = min(tile_q, N)
    tk = min(tile_kv, N)
    # Keep >=2 query-tile blocks when possible so both v7x TensorCores get work
    # under dimension_semantics=("parallel", "arbitrary").
    if N // tq < 2 and N % 16 == 0 and N >= 16:
        tq = N // 2
    assert N % tq == 0 and N % tk == 0 and N % tm == 0, "N must divide tile sizes"

    # ---- Kernel 1: fused QKV projection (head-major outputs) ----------------
    q, k, v = pl.pallas_call(
        qkv_proj_kernel,
        out_shape=(jax.ShapeDtypeStruct((H, N, dh), jnp.bfloat16),) * 3,
        grid_spec=pltpu.PrefetchScalarGridSpec(
            num_scalar_prefetch=0,
            grid=(N // tm,),
            in_specs=[
                pl.BlockSpec((tm, D), lambda i: (i, 0)),        # x row tile
                pl.BlockSpec((D, 3 * D), lambda i: (0, 0)),     # fused QKV weight (resident)
                pl.BlockSpec((1, 3 * D), lambda i: (0, 0)),     # fused QKV bias (resident)
            ],
            out_specs=(pl.BlockSpec((H, tm, dh), lambda i: (0, i, 0)),) * 3,
        ),
        compiler_params=pltpu.CompilerParams(
            dimension_semantics=("parallel",),
            vmem_limit_bytes=vmem_limit),
    )(x, wqkv, bqkv)

    nq, nk = N // tq, N // tk
    # Per-(query-tile, kv-tile) occupancy of the keep mask -> skip empty tiles
    # (real graph adjacency is sparse).  Flattened 1D int32 for SMEM prefetch.
    occ = (keep_mask.astype(jnp.int32)
           .reshape(nq, tq, nk, tk).sum(axis=(1, 3)) > 0).astype(jnp.int32).reshape(-1)

    cost = pl.CostEstimate(
        flops=int(4 * N * N * D + 2 * N * D * D + 4 * N * D * F),
        transcendentals=int(H * N * N),
        bytes_accessed=int(N * N                       # int8 mask
                           + 3 * 2 * N * D             # q/k/v bf16
                           + 2 * 4 * N * D             # x read + out write f32
                           + 2 * (H * dh * D + 2 * D * F)),
    )

    kernel = functools.partial(flash_gt_kernel, exp_dtype=exp_dtype)
    const2 = lambda i, j, occ_ref: (0, 0)
    const3 = lambda i, j, occ_ref: (0, 0, 0)

    # ---- Kernel 2: flash attention + FFN + LayerNorms -----------------------
    out = pl.pallas_call(
        kernel,
        out_shape=jax.ShapeDtypeStruct((N, D), x.dtype),
        grid_spec=pltpu.PrefetchScalarGridSpec(
            num_scalar_prefetch=1,                       # occ -> SMEM
            grid=(nq, nk),
            in_specs=[
                pl.BlockSpec((tq, D), lambda i, j, occ_ref: (i, 0)),          # x (residual)
                pl.BlockSpec((H, tq, dh), lambda i, j, occ_ref: (0, i, 0)),   # q (resident per q tile)
                pl.BlockSpec((H, tk, dh), lambda i, j, occ_ref: (0, j, 0)),   # k (streamed)
                pl.BlockSpec((H, tk, dh), lambda i, j, occ_ref: (0, j, 0)),   # v (streamed)
                pl.BlockSpec((tq, tk), lambda i, j, occ_ref: (i, j)),         # int8 keep-mask tile
                pl.BlockSpec((H, dh, D), const3),                             # W_O head-split (resident)
                pl.BlockSpec((1, D), const2),                                 # b_O
                pl.BlockSpec((1, D), const2),                                 # LN1 gamma
                pl.BlockSpec((1, D), const2),                                 # LN1 beta
                pl.BlockSpec((D, F), const2),                                 # W1
                pl.BlockSpec((1, F), const2),                                 # b1
                pl.BlockSpec((F, D), const2),                                 # W2
                pl.BlockSpec((1, D), const2),                                 # b2
                pl.BlockSpec((1, D), const2),                                 # LN2 gamma
                pl.BlockSpec((1, D), const2),                                 # LN2 beta
            ],
            out_specs=pl.BlockSpec((tq, D), lambda i, j, occ_ref: (i, 0)),
            scratch_shapes=[
                pltpu.VMEM((H, tq, 1), jnp.float32),    # running max
                pltpu.VMEM((H, tq, 1), jnp.float32),    # running denominator
                pltpu.VMEM((H, tq, dh), jnp.float32),   # running numerator
            ],
        ),
        compiler_params=pltpu.CompilerParams(
            dimension_semantics=("parallel", "arbitrary"),
            vmem_limit_bytes=vmem_limit),
        cost_estimate=cost,
    )(occ, x, q, k, v, keep_mask,
      woh, bo, ln1g, ln1b, w1, b1, w2, b2, ln2g, ln2b)
    return out


# ---------------------------------------------------------------------------
# Parameter packing (host-side layout/precision prep)
# ---------------------------------------------------------------------------
def init_params(key, dim_h, ffn_dim):
    ks = jax.random.split(key, 6)
    s = 0.1
    H = N_HEADS
    dh = dim_h // H

    def lin(k, fan_in, fan_out):
        kw, kb = jax.random.split(k)
        w = jax.random.normal(kw, (fan_in, fan_out), jnp.float32) * s
        b = jax.random.normal(kb, (1, fan_out), jnp.float32) * s
        return w, b

    wq, bq = lin(ks[0], dim_h, dim_h)
    wk, bk = lin(ks[1], dim_h, dim_h)
    wv, bv = lin(ks[2], dim_h, dim_h)
    wo, bo = lin(ks[3], dim_h, dim_h)
    w1, b1 = lin(ks[4], dim_h, ffn_dim)
    w2, b2 = lin(ks[5], ffn_dim, dim_h)

    scale = 1.0 / (dh ** 0.5)
    # Fused QKV weight; the 1/sqrt(dh) softmax scale is folded into Q (free).
    wqkv = jnp.concatenate([wq * scale, wk, wv], axis=1).astype(jnp.bfloat16)
    bqkv = jnp.concatenate([bq * scale, bk, bv], axis=1)                # f32
    # Output projection reshaped head-major so heads never get re-concatenated.
    woh = wo.reshape(H, dh, dim_h).astype(jnp.bfloat16)

    ln1g = jnp.ones((1, dim_h), jnp.float32)
    ln1b = jnp.zeros((1, dim_h), jnp.float32)
    ln2g = jnp.ones((1, dim_h), jnp.float32)
    ln2b = jnp.zeros((1, dim_h), jnp.float32)

    return (wqkv, bqkv, woh, bo, ln1g, ln1b,
            w1.astype(jnp.bfloat16), b1, w2.astype(jnp.bfloat16), b2,
            ln2g, ln2b)


# ---------------------------------------------------------------------------
# Pure-JAX reference (mirrors the kernel's bf16-matmul / f32-accumulate policy)
# ---------------------------------------------------------------------------
def reference_forward(x, keep_mask, params):
    (wqkv, bqkv, woh, bo, ln1g, ln1b, w1, b1, w2, b2, ln2g, ln2b) = params
    N, D = x.shape
    H = N_HEADS
    dh = D // H
    f32, bf16 = jnp.float32, jnp.bfloat16

    def layer_norm(h, g, b):
        mu = jnp.mean(h, axis=-1, keepdims=True)
        var = jnp.mean(jnp.square(h - mu), axis=-1, keepdims=True)
        return (h - mu) * jax.lax.rsqrt(var + LN_EPS) * g + b

    qkv = jnp.dot(x.astype(bf16), wqkv, preferred_element_type=f32) + bqkv
    q = qkv[:, :D].astype(bf16)            # scale already folded in
    k = qkv[:, D:2 * D].astype(bf16)
    v = qkv[:, 2 * D:].astype(bf16)

    def to_heads(t):
        return jnp.transpose(t.reshape(N, H, dh), (1, 0, 2))
    qh, kh, vh = to_heads(q), to_heads(k), to_heads(v)

    s = jnp.einsum('hqd,hkd->hqk', qh, kh, preferred_element_type=f32)
    s = jnp.where(keep_mask[None, :, :] > 0, s, MASK_NEG)
    p = jax.nn.softmax(s, axis=-1)
    o = jnp.einsum('hqk,hkd->hqd', p.astype(bf16), vh, preferred_element_type=f32)

    attn = jnp.einsum('hqc,hcf->qf', o.astype(bf16), woh,
                      preferred_element_type=f32) + bo

    h = layer_norm(x + attn, ln1g, ln1b)
    h_in2 = h
    f = jnp.dot(h.astype(bf16), w1, preferred_element_type=f32) + b1
    f = jnp.maximum(f, 0.0)
    f = jnp.dot(f.astype(bf16), w2, preferred_element_type=f32) + b2
    return layer_norm(h_in2 + f, ln2g, ln2b)


if __name__ == "__main__":
    N = 256          # number of graph nodes
    DIM_H = 32       # hidden dim
    FFN_DIM = 2 * DIM_H

    key = jax.random.PRNGKey(0)
    kx, km, kp = jax.random.split(key, 3)

    x = jax.random.normal(kx, (N, DIM_H), jnp.float32)

    # keep-mask: 1 = attend, 0 = blocked; always allow self-loops.
    keep = jax.random.bernoulli(km, p=0.7, shape=(N, N))
    keep = keep | jnp.eye(N, dtype=bool)
    keep_mask = keep.astype(jnp.int8)

    params = init_params(kp, DIM_H, FFN_DIM)

    out = graph_transformer_layer(x, keep_mask, params)
    out = jax.block_until_ready(out)

    assert out.shape == (N, DIM_H)
    assert bool(jnp.all(jnp.isfinite(out)))

    ref = reference_forward(x, keep_mask, params)
    max_err = float(jnp.max(jnp.abs(out - ref)))
    assert max_err < 5e-2, f"max abs error vs reference: {max_err}"

    print("KERNEL_OK")
</pallas_src>

<mosaic_0001>
module attributes {stable_mosaic.version = 11 : i64} {
  func.func @qkv_proj_kernel(%arg0: i32, %arg1: memref<256x32xf32, #tpu.memory_space<vmem>>, %arg2: memref<32x96xbf16, #tpu.memory_space<vmem>>, %arg3: memref<1x96xf32, #tpu.memory_space<vmem>>, %arg4: memref<4x256x8xbf16, #tpu.memory_space<vmem>>, %arg5: memref<4x256x8xbf16, #tpu.memory_space<vmem>>, %arg6: memref<4x256x8xbf16, #tpu.memory_space<vmem>>) attributes {dimension_semantics = [#tpu.dimension_semantics<parallel>], iteration_bounds = array<i64: 1>, scalar_prefetch = 0 : i64, scratch_operands = 0 : i64, tpu.core_type = #tpu.core_type<tc>, window_params = [{transform_indices = @transform_0, window_bounds = array<i64: 256, 32>}, {pipeline_mode = #tpu.pipeline_mode<synchronous>, transform_indices = @transform_1, window_bounds = array<i64: 32, 96>}, {pipeline_mode = #tpu.pipeline_mode<synchronous>, transform_indices = @transform_2, window_bounds = array<i64: 1, 96>}, {transform_indices = @transform_3, window_bounds = array<i64: 4, 256, 8>}, {transform_indices = @transform_4, window_bounds = array<i64: 4, 256, 8>}, {transform_indices = @transform_5, window_bounds = array<i64: 4, 256, 8>}]} {
    %c0 = arith.constant 0 : index
    %c0_0 = arith.constant 0 : index
    %0 = vector.load %arg1[%c0, %c0_0] : memref<256x32xf32, #tpu.memory_space<vmem>>, vector<256x32xf32>
    %1 = arith.truncf %0 : vector<256x32xf32> to vector<256x32xbf16>
    %c0_1 = arith.constant 0 : index
    %c0_2 = arith.constant 0 : index
    %2 = vector.load %arg2[%c0_1, %c0_2] : memref<32x96xbf16, #tpu.memory_space<vmem>>, vector<32x96xbf16>
    %cst = arith.constant dense<0.000000e+00> : vector<256x96xf32>
    %3 = tpu.matmul %1, %2, %cst {dimension_numbers = #tpu.dot_dimension_numbers<[1], [0], [0], [1], [0, 0, 1, 1], [], []>} : vector<256x32xbf16>, vector<32x96xbf16>, vector<256x96xf32> -> vector<256x96xf32>
    %c0_3 = arith.constant 0 : index
    %c0_4 = arith.constant 0 : index
    %4 = vector.load %arg3[%c0_3, %c0_4] : memref<1x96xf32, #tpu.memory_space<vmem>>, vector<1x96xf32>
    %5 = vector.broadcast %4 : vector<1x96xf32> to vector<256x96xf32>
    %6 = arith.addf %3, %5 : vector<256x96xf32>
    %7 = arith.truncf %6 : vector<256x96xf32> to vector<256x96xbf16>
    %8 = vector.extract_strided_slice %7 {offsets = [0, 0], sizes = [256, 8], strides = [1, 1]} : vector<256x96xbf16> to vector<256x8xbf16>
    %c0_5 = arith.constant 0 : index
    %c0_6 = arith.constant 0 : index
    %c0_7 = arith.constant 0 : index
    %9 = vector.load %arg4[%c0_5, %c0_6, %c0_7] : memref<4x256x8xbf16, #tpu.memory_space<vmem>>, vector<1x256x8xbf16>
    %10 = vector.shape_cast %9 : vector<1x256x8xbf16> to vector<256x8xbf16>
    %11 = vector.shape_cast %8 : vector<256x8xbf16> to vector<1x256x8xbf16>
    tpu.vector_store %arg4[%c0_5, %c0_6, %c0_7], %11 {strides = array<i32>} : memref<4x256x8xbf16, #tpu.memory_space<vmem>>, vector<1x256x8xbf16>,
    %12 = vector.extract_strided_slice %7 {offsets = [0, 32], sizes = [256, 8], strides = [1, 1]} : vector<256x96xbf16> to vector<256x8xbf16>
    %c0_8 = arith.constant 0 : index
    %c0_9 = arith.constant 0 : index
    %c0_10 = arith.constant 0 : index
    %13 = vector.load %arg5[%c0_8, %c0_9, %c0_10] : memref<4x256x8xbf16, #tpu.memory_space<vmem>>, vector<1x256x8xbf16>
    %14 = vector.shape_cast %13 : vector<1x256x8xbf16> to vector<256x8xbf16>
    %15 = vector.shape_cast %12 : vector<256x8xbf16> to vector<1x256x8xbf16>
    tpu.vector_store %arg5[%c0_8, %c0_9, %c0_10], %15 {strides = array<i32>} : memref<4x256x8xbf16, #tpu.memory_space<vmem>>, vector<1x256x8xbf16>,
    %16 = vector.extract_strided_slice %7 {offsets = [0, 64], sizes = [256, 8], strides = [1, 1]} : vector<256x96xbf16> to vector<256x8xbf16>
    %c0_11 = arith.constant 0 : index
    %c0_12 = arith.constant 0 : index
    %c0_13 = arith.constant 0 : index
    %17 = vector.load %arg6[%c0_11, %c0_12, %c0_13] : memref<4x256x8xbf16, #tpu.memory_space<vmem>>, vector<1x256x8xbf16>
    %18 = vector.shape_cast %17 : vector<1x256x8xbf16> to vector<256x8xbf16>
    %19 = vector.shape_cast %16 : vector<256x8xbf16> to vector<1x256x8xbf16>
    tpu.vector_store %arg6[%c0_11, %c0_12, %c0_13], %19 {strides = array<i32>} : memref<4x256x8xbf16, #tpu.memory_space<vmem>>, vector<1x256x8xbf16>,
    %20 = vector.extract_strided_slice %7 {offsets = [0, 8], sizes = [256, 8], strides = [1, 1]} : vector<256x96xbf16> to vector<256x8xbf16>
    %c1 = arith.constant 1 : index
    %c0_14 = arith.constant 0 : index
    %c0_15 = arith.constant 0 : index
    %21 = vector.load %arg4[%c1, %c0_14, %c0_15] : memref<4x256x8xbf16, #tpu.memory_space<vmem>>, vector<1x256x8xbf16>
    %22 = vector.shape_cast %21 : vector<1x256x8xbf16> to vector<256x8xbf16>
    %23 = vector.shape_cast %20 : vector<256x8xbf16> to vector<1x256x8xbf16>
    tpu.vector_store %arg4[%c1, %c0_14, %c0_15], %23 {strides = array<i32>} : memref<4x256x8xbf16, #tpu.memory_space<vmem>>, vector<1x256x8xbf16>,
    %24 = vector.extract_strided_slice %7 {offsets = [0, 40], sizes = [256, 8], strides = [1, 1]} : vector<256x96xbf16> to vector<256x8xbf16>
    %c1_16 = arith.constant 1 : index
    %c0_17 = arith.constant 0 : index
    %c0_18 = arith.constant 0 : index
    %25 = vector.load %arg5[%c1_16, %c0_17, %c0_18] : memref<4x256x8xbf16, #tpu.memory_space<vmem>>, vector<1x256x8xbf16>
    %26 = vector.shape_cast %25 : vector<1x256x8xbf16> to vector<256x8xbf16>
    %27 = vector.shape_cast %24 : vector<256x8xbf16> to vector<1x256x8xbf16>
    tpu.vector_store %arg5[%c1_16, %c0_17, %c0_18], %27 {strides = array<i32>} : memref<4x256x8xbf16, #tpu.memory_space<vmem>>, vector<1x256x8xbf16>,
    %28 = vector.extract_strided_slice %7 {offsets = [0, 72], sizes = [256, 8], strides = [1, 1]} : vector<256x96xbf16> to vector<256x8xbf16>
    %c1_19 = arith.constant 1 : index
    %c0_20 = arith.constant 0 : index
    %c0_21 = arith.constant 0 : index
    %29 = vector.load %arg6[%c1_19, %c0_20, %c0_21] : memref<4x256x8xbf16, #tpu.memory_space<vmem>>, vector<1x256x8xbf16>
    %30 = vector.shape_cast %29 : vector<1x256x8xbf16> to vector<256x8xbf16>
    %31 = vector.shape_cast %28 : vector<256x8xbf16> to vector<1x256x8xbf16>
    tpu.vector_store %arg6[%c1_19, %c0_20, %c0_21], %31 {strides = array<i32>} : memref<4x256x8xbf16, #tpu.memory_space<vmem>>, vector<1x256x8xbf16>,
    %32 = vector.extract_strided_slice %7 {offsets = [0, 16], sizes = [256, 8], strides = [1, 1]} : vector<256x96xbf16> to vector<256x8xbf16>
    %c2 = arith.constant 2 : index
    %c0_22 = arith.constant 0 : index
    %c0_23 = arith.constant 0 : index
    %33 = vector.load %arg4[%c2, %c0_22, %c0_23] : memref<4x256x8xbf16, #tpu.memory_space<vmem>>, vector<1x256x8xbf16>
    %34 = vector.shape_cast %33 : vector<1x256x8xbf16> to vector<256x8xbf16>
    %35 = vector.shape_cast %32 : vector<256x8xbf16> to vector<1x256x8xbf16>
    tpu.vector_store %arg4[%c2, %c0_22, %c0_23], %35 {strides = array<i32>} : memref<4x256x8xbf16, #tpu.memory_space<vmem>>, vector<1x256x8xbf16>,
    %36 = vector.extract_strided_slice %7 {offsets = [0, 48], sizes = [256, 8], strides = [1, 1]} : vector<256x96xbf16> to vector<256x8xbf16>
    %c2_24 = arith.constant 2 : index
    %c0_25 = arith.constant 0 : index
    %c0_26 = arith.constant 0 : index
    %37 = vector.load %arg5[%c2_24, %c0_25, %c0_26] : memref<4x256x8xbf16, #tpu.memory_space<vmem>>, vector<1x256x8xbf16>
    %38 = vector.shape_cast %37 : vector<1x256x8xbf16> to vector<256x8xbf16>
    %39 = vector.shape_cast %36 : vector<256x8xbf16> to vector<1x256x8xbf16>
    tpu.vector_store %arg5[%c2_24, %c0_25, %c0_26], %39 {strides = array<i32>} : memref<4x256x8xbf16, #tpu.memory_space<vmem>>, vector<1x256x8xbf16>,
    %40 = vector.extract_strided_slice %7 {offsets = [0, 80], sizes = [256, 8], strides = [1, 1]} : vector<256x96xbf16> to vector<256x8xbf16>
    %c2_27 = arith.constant 2 : index
    %c0_28 = arith.constant 0 : index
    %c0_29 = arith.constant 0 : index
    %41 = vector.load %arg6[%c2_27, %c0_28, %c0_29] : memref<4x256x8xbf16, #tpu.memory_space<vmem>>, vector<1x256x8xbf16>
    %42 = vector.shape_cast %41 : vector<1x256x8xbf16> to vector<256x8xbf16>
    %43 = vector.shape_cast %40 : vector<256x8xbf16> to vector<1x256x8xbf16>
    tpu.vector_store %arg6[%c2_27, %c0_28, %c0_29], %43 {strides = array<i32>} : memref<4x256x8xbf16, #tpu.memory_space<vmem>>, vector<1x256x8xbf16>,
    %44 = vector.extract_strided_slice %7 {offsets = [0, 24], sizes = [256, 8], strides = [1, 1]} : vector<256x96xbf16> to vector<256x8xbf16>
    %c3 = arith.constant 3 : index
    %c0_30 = arith.constant 0 : index
    %c0_31 = arith.constant 0 : index
    %45 = vector.load %arg4[%c3, %c0_30, %c0_31] : memref<4x256x8xbf16, #tpu.memory_space<vmem>>, vector<1x256x8xbf16>
    %46 = vector.shape_cast %45 : vector<1x256x8xbf16> to vector<256x8xbf16>
    %47 = vector.shape_cast %44 : vector<256x8xbf16> to vector<1x256x8xbf16>
    tpu.vector_store %arg4[%c3, %c0_30, %c0_31], %47 {strides = array<i32>} : memref<4x256x8xbf16, #tpu.memory_space<vmem>>, vector<1x256x8xbf16>,
    %48 = vector.extract_strided_slice %7 {offsets = [0, 56], sizes = [256, 8], strides = [1, 1]} : vector<256x96xbf16> to vector<256x8xbf16>
    %c3_32 = arith.constant 3 : index
    %c0_33 = arith.constant 0 : index
    %c0_34 = arith.constant 0 : index
    %49 = vector.load %arg5[%c3_32, %c0_33, %c0_34] : memref<4x256x8xbf16, #tpu.memory_space<vmem>>, vector<1x256x8xbf16>
    %50 = vector.shape_cast %49 : vector<1x256x8xbf16> to vector<256x8xbf16>
    %51 = vector.shape_cast %48 : vector<256x8xbf16> to vector<1x256x8xbf16>
    tpu.vector_store %arg5[%c3_32, %c0_33, %c0_34], %51 {strides = array<i32>} : memref<4x256x8xbf16, #tpu.memory_space<vmem>>, vector<1x256x8xbf16>,
    %52 = vector.extract_strided_slice %7 {offsets = [0, 88], sizes = [256, 8], strides = [1, 1]} : vector<256x96xbf16> to vector<256x8xbf16>
    %c3_35 = arith.constant 3 : index
    %c0_36 = arith.constant 0 : index
    %c0_37 = arith.constant 0 : index
    %53 = vector.load %arg6[%c3_35, %c0_36, %c0_37] : memref<4x256x8xbf16, #tpu.memory_space<vmem>>, vector<1x256x8xbf16>
    %54 = vector.shape_cast %53 : vector<1x256x8xbf16> to vector<256x8xbf16>
    %55 = vector.shape_cast %52 : vector<256x8xbf16> to vector<1x256x8xbf16>
    tpu.vector_store %arg6[%c3_35, %c0_36, %c0_37], %55 {strides = array<i32>} : memref<4x256x8xbf16, #tpu.memory_space<vmem>>, vector<1x256x8xbf16>,
    return
  }
  func.func @transform_0(%arg0: i32) -> (i32, i32) {
    %c0_i32 = arith.constant 0 : i32
    %c0_i32_0 = arith.constant 0 : i32
    return %arg0, %c0_i32 : i32, i32
  }
  func.func @transform_1(%arg0: i32) -> (i32, i32) {
    %c0_i32 = arith.constant 0 : i32
    %c0_i32_0 = arith.constant 0 : i32
    %c0_i32_1 = arith.constant 0 : i32
    return %c0_i32, %c0_i32_0 : i32, i32
  }
  func.func @transform_2(%arg0: i32) -> (i32, i32) {
    %c0_i32 = arith.constant 0 : i32
    %c0_i32_0 = arith.constant 0 : i32
    %c0_i32_1 = arith.constant 0 : i32
    return %c0_i32, %c0_i32_0 : i32, i32
  }
  func.func @transform_3(%arg0: i32) -> (i32, i32, i32) {
    %c0_i32 = arith.constant 0 : i32
    %c0_i32_0 = arith.constant 0 : i32
    %c0_i32_1 = arith.constant 0 : i32
    return %c0_i32, %arg0, %c0_i32_0 : i32, i32, i32
  }
  func.func @transform_4(%arg0: i32) -> (i32, i32, i32) {
    %c0_i32 = arith.constant 0 : i32
    %c0_i32_0 = arith.constant 0 : i32
    %c0_i32_1 = arith.constant 0 : i32
    return %c0_i32, %arg0, %c0_i32_0 : i32, i32, i32
  }
  func.func @transform_5(%arg0: i32) -> (i32, i32, i32) {
    %c0_i32 = arith.constant 0 : i32
    %c0_i32_0 = arith.constant 0 : i32
    %c0_i32_1 = arith.constant 0 : i32
    return %c0_i32, %arg0, %c0_i32_0 : i32, i32, i32
  }
}

</mosaic_0001>

<llo_original>
// kernel: tpu_custom_call.1
$region0: #{tpu_custom_call.1}
  #allocation0 [shape = 'u32[]', space=smem, size = 0x4, offset = 0x4, fixed_abs, tag = 'smem constant byte address 0x4 - core index']
  #allocation1 [shape = 'u32[72,128]{1,0:T(1,128)}', space=vmem, size = 0x9000, scoped, tag = 'internal scratch']
  %s0 = inlined_call_operand.vmem [shape: f32[256,32], index: 0, kind: input, shape index: {}]
  %s1 = inlined_call_operand.vmem [shape: bf16[32,96], index: 1, kind: input, shape index: {}]
  %s2 = inlined_call_operand.vmem [shape: f32[1,96], index: 2, kind: input, shape index: {}]
  %s3 = inlined_call_operand.vmem [shape: bf16[4,256,8], index: 3, kind: output, shape index: {0}]
  %s4 = inlined_call_operand.vmem [shape: bf16[4,256,8], index: 4, kind: output, shape index: {1}]
  %s5 = inlined_call_operand.vmem [shape: bf16[4,256,8], index: 5, kind: output, shape index: {2}]
  %6 = xla_tuple %s3, %s4, %s5
  %s7 = sld [smem:[#allocation0]]
  $region38: #{tpu_custom_call.1} parent=0
    _
  %s9 = ssub.s32 1, %s7
  %s10 = scalar_select 0, %s9, %s7
  // Predicated region
  $region2: #{tpu_custom_call.1} parent=0 // pred_check
    _
  $region3: #{tpu_custom_call.1} parent=0 // pred_check_branch
    %12 = sbr.rel (0) target = $region5
  $region4: #{tpu_custom_call.1} parent=0 // pred_region
    _
  $region5: #{tpu_custom_call.1} parent=0 // pred_fallthru
    _
  // Predicated region
  $region6: #{tpu_custom_call.1} parent=0 // pred_check
    _
  $region7: #{tpu_custom_call.1} parent=0 // pred_check_branch
    %14 = sbr.rel (0) target = $region9
  $region8: #{tpu_custom_call.1} parent=0 // pred_region
    _
  $region9: #{tpu_custom_call.1} parent=0 // pred_fallthru
    _
  // Predicated region
  $region10: #{tpu_custom_call.1} parent=0 // pred_check
    _
  $region11: #{tpu_custom_call.1} parent=0 // pred_check_branch
    %16 = sbr.rel (0) target = $region13
  $region12: #{tpu_custom_call.1} parent=0 // pred_region
    _
  $region13: #{tpu_custom_call.1} parent=0 // pred_fallthru
    _
  %v18 = vld [vmem:[%s0] sm:$0xff]
  %v19 = vld [vmem:[%s0 + $0x8] sm:$0xff]
  %v20 = vld [vmem:[%s0 + $0x10] sm:$0xff]
  %v21 = vld [vmem:[%s0 + $0x18] sm:$0xff]
  %v22 = vld [vmem:[%s0 + $0x20] sm:$0xff]
  %v23 = vld [vmem:[%s0 + $0x28] sm:$0xff]
  %v24 = vld [vmem:[%s0 + $0x30] sm:$0xff]
  %v25 = vld [vmem:[%s0 + $0x38] sm:$0xff]
  %v26 = vld [vmem:[%s0 + $0x40] sm:$0xff]
  %v27 = vld [vmem:[%s0 + $0x48] sm:$0xff]
  %v28 = vld [vmem:[%s0 + $0x50] sm:$0xff]
  %v29 = vld [vmem:[%s0 + $0x58] sm:$0xff]
  %v30 = vld [vmem:[%s0 + $0x60] sm:$0xff]
  %v31 = vld [vmem:[%s0 + $0x68] sm:$0xff]
  %v32 = vld [vmem:[%s0 + $0x70] sm:$0xff]
  %v33 = vld [vmem:[%s0 + $0x78] sm:$0xff]
  %v34 = vld [vmem:[%s0 + $0x80] sm:$0xff]
  %v35 = vld [vmem:[%s0 + $0x88] sm:$0xff]
  %v36 = vld [vmem:[%s0 + $0x90] sm:$0xff]
  %v37 = vld [vmem:[%s0 + $0x98] sm:$0xff]
  %v38 = vld [vmem:[%s0 + $0xa0] sm:$0xff]
  %v39 = vld [vmem:[%s0 + $0xa8] sm:$0xff]
  %v40 = vld [vmem:[%s0 + $0xb0] sm:$0xff]
  %v41 = vld [vmem:[%s0 + $0xb8] sm:$0xff]
  %v42 = vld [vmem:[%s0 + $0xc0] sm:$0xff]
  %v43 = vld [vmem:[%s0 + $0xc8] sm:$0xff]
  %v44 = vld [vmem:[%s0 + $0xd0] sm:$0xff]
  %v45 = vld [vmem:[%s0 + $0xd8] sm:$0xff]
  %v46 = vld [vmem:[%s0 + $0xe0] sm:$0xff]
  %v47 = vld [vmem:[%s0 + $0xe8] sm:$0xff]
  %v48 = vld [vmem:[%s0 + $0xf0] sm:$0xff]
  %v49 = vld [vmem:[%s0 + $0xf8] sm:$0xff]
  %v50 = vpack.c.bf16 %v19, %v18
  %v51 = vpack.c.bf16 %v21, %v20
  %v52 = vpack.c.bf16 %v23, %v22
  %v53 = vpack.c.bf16 %v25, %v24
  %v54 = vpack.c.bf16 %v27, %v26
  %v55 = vpack.c.bf16 %v29, %v28
  %v56 = vpack.c.bf16 %v31, %v30
  %v57 = vpack.c.bf16 %v33, %v32
  %v58 = vpack.c.bf16 %v35, %v34
  %v59 = vpack.c.bf16 %v37, %v36
  %v60 = vpack.c.bf16 %v39, %v38
  %v61 = vpack.c.bf16 %v41, %v40
  %v62 = vpack.c.bf16 %v43, %v42
  %v63 = vpack.c.bf16 %v45, %v44
  %v64 = vpack.c.bf16 %v47, %v46
  %v65 = vpack.c.bf16 %v49, %v48
  %v66 = vld [vmem:[%s1] sm:$0xf]
  %v67 = vld [vmem:[%s1 + $0x4] sm:$0xf]
  %v68 = vld [vmem:[%s1 + $0x8] sm:$0xf]
  %v69 = vld [vmem:[%s1 + $0xc] sm:$0xf]
  %v70 = vld [vmem:[%s2] sm:$0x1]
  %v72 = vperm.slane %v70, 0
  %v78 = vunpack.c.l.b16 %v66
  %v79 = vunpack.c.l.b16 %v67
  %v80 = vunpack.c.l.b16 %v68
  %v81 = vunpack.c.l.b16 %v69
  %v82 = vpack.c.b16 %v79, %v78
  %v83 = vpack.c.b16 %v81, %v80
  %vm86 = vcmask 261120
  %v88 = vsel %vm86, %v50, 0
  %v91 = vsel %vm86, %v51, 0
  %v94 = vsel %vm86, %v52, 0
  %v97 = vsel %vm86, %v53, 0
  %v100 = vsel %vm86, %v54, 0
  %v103 = vsel %vm86, %v55, 0
  %v106 = vsel %vm86, %v56, 0
  %v109 = vsel %vm86, %v57, 0
  %v112 = vsel %vm86, %v58, 0
  %v115 = vsel %vm86, %v59, 0
  %v118 = vsel %vm86, %v60, 0
  %v121 = vsel %vm86, %v61, 0
  %v124 = vsel %vm86, %v62, 0
  %v127 = vsel %vm86, %v63, 0
  %v130 = vsel %vm86, %v64, 0
  %v133 = vsel %vm86, %v65, 0
  %135 = vmatpush.bf16.msra.mxu0 0
  %136 = vmatpush.bf16.msra.mxu0 0
  %137 = vmatpush.bf16.msra.mxu0 0
  %138 = vmatpush.bf16.msra.mxu0 0
  %139 = vmatpush.bf16.msra.mxu0 0
  %140 = vmatpush.bf16.msra.mxu0 0
  %141 = vmatpush.bf16.msra.mxu0 %v83
  %142 = vmatpush.bf16.msra.mxu0 %v82
  %143 = vmatmul.bf16.gmra.mxu0 %v88
  %v144 = vpop.f32.mrf.mxu0
  %v145 = vadd.f32 %v72, %v144
  %v146 = vpop.f32.mrf.mxu0
  %v147 = vadd.f32 %v72, %v146
  %148 = vmatmul.bf16.gmra.mxu0 %v91
  %v149 = vpop.f32.mrf.mxu0
  %v150 = vadd.f32 %v72, %v149
  %v151 = vpop.f32.mrf.mxu0
  %v152 = vadd.f32 %v72, %v151
  %153 = vmatmul.bf16.gmra.mxu0 %v94
  %v154 = vpop.f32.mrf.mxu0
  %v155 = vadd.f32 %v72, %v154
  %v156 = vpop.f32.mrf.mxu0
  %v157 = vadd.f32 %v72, %v156
  %158 = vmatmul.bf16.gmra.mxu0 %v97
  %v159 = vpop.f32.mrf.mxu0
  %v160 = vadd.f32 %v72, %v159
  %v161 = vpop.f32.mrf.mxu0
  %v162 = vadd.f32 %v72, %v161
  %163 = vmatmul.bf16.gmra.mxu0 %v100
  %v164 = vpop.f32.mrf.mxu0
  %v165 = vadd.f32 %v72, %v164
  %v166 = vpop.f32.mrf.mxu0
  %v167 = vadd.f32 %v72, %v166
  %168 = vmatmul.bf16.gmra.mxu0 %v103
  %v169 = vpop.f32.mrf.mxu0
  %v170 = vadd.f32 %v72, %v169
  %v171 = vpop.f32.mrf.mxu0
  %v172 = vadd.f32 %v72, %v171
  %173 = vmatmul.bf16.gmra.mxu0 %v106
  %v174 = vpop.f32.mrf.mxu0
  %v175 = vadd.f32 %v72, %v174
  %v176 = vpop.f32.mrf.mxu0
  %v177 = vadd.f32 %v72, %v176
  %178 = vmatmul.bf16.gmra.mxu0 %v109
  %v179 = vpop.f32.mrf.mxu0
  %v180 = vadd.f32 %v72, %v179
  %v181 = vpop.f32.mrf.mxu0
  %v182 = vadd.f32 %v72, %v181
  %183 = vmatmul.bf16.gmra.mxu0 %v112
  %v184 = vpop.f32.mrf.mxu0
  %v185 = vadd.f32 %v72, %v184
  %v186 = vpop.f32.mrf.mxu0
  %v187 = vadd.f32 %v72, %v186
  %188 = vmatmul.bf16.gmra.mxu0 %v115
  %v189 = vpop.f32.mrf.mxu0
  %v190 = vadd.f32 %v72, %v189
  %v191 = vpop.f32.mrf.mxu0
  %v192 = vadd.f32 %v72, %v191
  %193 = vmatmul.bf16.gmra.mxu0 %v118
  %v194 = vpop.f32.mrf.mxu0
  %v195 = vadd.f32 %v72, %v194
  %v196 = vpop.f32.mrf.mxu0
  %v197 = vadd.f32 %v72, %v196
  %198 = vmatmul.bf16.gmra.mxu0 %v121
  %v199 = vpop.f32.mrf.mxu0
  %v200 = vadd.f32 %v72, %v199
  %v201 = vpop.f32.mrf.mxu0
  %v202 = vadd.f32 %v72, %v201
  %203 = vmatmul.bf16.gmra.mxu0 %v124
  %v204 = vpop.f32.mrf.mxu0
  %v205 = vadd.f32 %v72, %v204
  %v206 = vpop.f32.mrf.mxu0
  %v207 = vadd.f32 %v72, %v206
  %208 = vmatmul.bf16.gmra.mxu0 %v127
  %v209 = vpop.f32.mrf.mxu0
  %v210 = vadd.f32 %v72, %v209
  %v211 = vpop.f32.mrf.mxu0
  %v212 = vadd.f32 %v72, %v211
  %213 = vmatmul.bf16.gmra.mxu0 %v130
  %v214 = vpop.f32.mrf.mxu0
  %v215 = vadd.f32 %v72, %v214
  %v216 = vpop.f32.mrf.mxu0
  %v217 = vadd.f32 %v72, %v216
  %218 = vmatmul.bf16.gmra.mxu0 %v133
  %v219 = vpop.f32.mrf.mxu0
  %v220 = vadd.f32 %v72, %v219
  %v221 = vpop.f32.mrf.mxu0
  %v222 = vadd.f32 %v72, %v221
  %223 = vdwg.mxu0
  %v224 = vpack.c.bf16 %v145, %v145
  %v225 = vpack.c.bf16 %v147, %v147
  %v226 = vpack.c.bf16 %v150, %v150
  %v227 = vpack.c.bf16 %v152, %v152
  %v228 = vpack.c.bf16 %v155, %v155
  %v229 = vpack.c.bf16 %v157, %v157
  %v230 = vpack.c.bf16 %v160, %v160
  %v231 = vpack.c.bf16 %v162, %v162
  %v232 = vpack.c.bf16 %v165, %v165
  %v233 = vpack.c.bf16 %v167, %v167
  %v234 = vpack.c.bf16 %v170, %v170
  %v235 = vpack.c.bf16 %v172, %v172
  %v236 = vpack.c.bf16 %v175, %v175
  %v237 = vpack.c.bf16 %v177, %v177
  %v238 = vpack.c.bf16 %v180, %v180
  %v239 = vpack.c.bf16 %v182, %v182
  %v240 = vpack.c.bf16 %v185, %v185
  %v241 = vpack.c.bf16 %v187, %v187
  %v242 = vpack.c.bf16 %v190, %v190
  %v243 = vpack.c.bf16 %v192, %v192
  %v244 = vpack.c.bf16 %v195, %v195
  %v245 = vpack.c.bf16 %v197, %v197
  %v246 = vpack.c.bf16 %v200, %v200
  %v247 = vpack.c.bf16 %v202, %v202
  %v248 = vpack.c.bf16 %v205, %v205
  %v249 = vpack.c.bf16 %v207, %v207
  %v250 = vpack.c.bf16 %v210, %v210
  %v251 = vpack.c.bf16 %v212, %v212
  %v252 = vpack.c.bf16 %v215, %v215
  %v253 = vpack.c.bf16 %v217, %v217
  %v254 = vpack.c.bf16 %v220, %v220
  %v255 = vpack.c.bf16 %v222, %v222
  %vm256 = vcmask 60416
  %257 = vst.msk [vmem:[%s3] sm:$0xf] %vm256, %v224
  %258 = vst.msk [vmem:[%s3 + $0x4] sm:$0xf] %vm256, %v225
  %259 = vst.msk [vmem:[%s3 + $0x8] sm:$0xf] %vm256, %v226
  %260 = vst.msk [vmem:[%s3 + $0xc] sm:$0xf] %vm256, %v227
  %261 = vst.msk [vmem:[%s3 + $0x10] sm:$0xf] %vm256, %v228
  %262 = vst.msk [vmem:[%s3 + $0x14] sm:$0xf] %vm256, %v229
  %263 = vst.msk [vmem:[%s3 + $0x18] sm:$0xf] %vm256, %v230
  %264 = vst.msk [vmem:[%s3 + $0x1c] sm:$0xf] %vm256, %v231
  %265 = vst.msk [vmem:[%s3 + $0x20] sm:$0xf] %vm256, %v232
  %266 = vst.msk [vmem:[%s3 + $0x24] sm:$0xf] %vm256, %v233
  %267 = vst.msk [vmem:[%s3 + $0x28] sm:$0xf] %vm256, %v234
  %268 = vst.msk [vmem:[%s3 + $0x2c] sm:$0xf] %vm256, %v235
  %269 = vst.msk [vmem:[%s3 + $0x30] sm:$0xf] %vm256, %v236
  %270 = vst.msk [vmem:[%s3 + $0x34] sm:$0xf] %vm256, %v237
  %271 = vst.msk [vmem:[%s3 + $0x38] sm:$0xf] %vm256, %v238
  %272 = vst.msk [vmem:[%s3 + $0x3c] sm:$0xf] %vm256, %v239
  %273 = vst.msk [vmem:[%s3 + $0x40] sm:$0xf] %vm256, %v240
  %274 = vst.msk [vmem:[%s3 + $0x44] sm:$0xf] %vm256, %v241
  %275 = vst.msk [vmem:[%s3 + $0x48] sm:$0xf] %vm256, %v242
  %276 = vst.msk [vmem:[%s3 + $0x4c] sm:$0xf] %vm256, %v243
  %277 = vst.msk [vmem:[%s3 + $0x50] sm:$0xf] %vm256, %v244
  %278 = vst.msk [vmem:[%s3 + $0x54] sm:$0xf] %vm256, %v245
  %279 = vst.msk [vmem:[%s3 + $0x58] sm:$0xf] %vm256, %v246
  %280 = vst.msk [vmem:[%s3 + $0x5c] sm:$0xf] %vm256, %v247
  %281 = vst.msk [vmem:[%s3 + $0x60] sm:$0xf] %vm256, %v248
  %282 = vst.msk [vmem:[%s3 + $0x64] sm:$0xf] %vm256, %v249
  %283 = vst.msk [vmem:[%s3 + $0x68] sm:$0xf] %vm256, %v250
  %284 = vst.msk [vmem:[%s3 + $0x6c] sm:$0xf] %vm256, %v251
  %285 = vst.msk [vmem:[%s3 + $0x70] sm:$0xf] %vm256, %v252
  %286 = vst.msk [vmem:[%s3 + $0x74] sm:$0xf] %vm256, %v253
  %287 = vst.msk [vmem:[%s3 + $0x78] sm:$0xf] %vm256, %v254
  %288 = vst.msk [vmem:[%s3 + $0x7c] sm:$0xf] %vm256, %v255
  %321 = vrot.lane.b32.xlu0 %v224, 96
  %v322 = vpop.permute.xlu0 %321
  %323 = vrot.lane.b32.xlu0 %v225, 96
  %v324 = vpop.permute.xlu0 %323
  %325 = vrot.lane.b32.xlu0 %v226, 96
  %v326 = vpop.permute.xlu0 %325
  %327 = vrot.lane.b32.xlu0 %v227, 96
  %v328 = vpop.permute.xlu0 %327
  %329 = vrot.lane.b32.xlu0 %v228, 96
  %v330 = vpop.permute.xlu0 %329
  %331 = vrot.lane.b32.xlu0 %v229, 96
  %v332 = vpop.permute.xlu0 %331
  %333 = vrot.lane.b32.xlu0 %v230, 96
  %v334 = vpop.permute.xlu0 %333
  %335 = vrot.lane.b32.xlu0 %v231, 96
  %v336 = vpop.permute.xlu0 %335
  %337 = vrot.lane.b32.xlu0 %v232, 96
  %v338 = vpop.permute.xlu0 %337
  %339 = vrot.lane.b32.xlu0 %v233, 96
  %v340 = vpop.permute.xlu0 %339
  %341 = vrot.lane.b32.xlu0 %v234, 96
  %v342 = vpop.permute.xlu0 %341
  %343 = vrot.lane.b32.xlu0 %v235, 96
  %v344 = vpop.permute.xlu0 %343
  %345 = vrot.lane.b32.xlu0 %v236, 96
  %v346 = vpop.permute.xlu0 %345
  %347 = vrot.lane.b32.xlu0 %v237, 96
  %v348 = vpop.permute.xlu0 %347
  %349 = vrot.lane.b32.xlu0 %v238, 96
  %v350 = vpop.permute.xlu0 %349
  %351 = vrot.lane.b32.xlu0 %v239, 96
  %v352 = vpop.permute.xlu0 %351
  %353 = vrot.lane.b32.xlu0 %v240, 96
  %v354 = vpop.permute.xlu0 %353
  %355 = vrot.lane.b32.xlu0 %v241, 96
  %v356 = vpop.permute.xlu0 %355
  %357 = vrot.lane.b32.xlu0 %v242, 96
  %v358 = vpop.permute.xlu0 %357
  %359 = vrot.lane.b32.xlu0 %v243, 96
  %v360 = vpop.permute.xlu0 %359
  %361 = vrot.lane.b32.xlu0 %v244, 96
  %v362 = vpop.permute.xlu0 %361
  %363 = vrot.lane.b32.xlu0 %v245, 96
  %v364 = vpop.permute.xlu0 %363
  %365 = vrot.lane.b32.xlu0 %v246, 96
  %v366 = vpop.permute.xlu0 %365
  %367 = vrot.lane.b32.xlu0 %v247, 96
  %v368 = vpop.permute.xlu0 %367
  %369 = vrot.lane.b32.xlu0 %v248, 96
  %v370 = vpop.permute.xlu0 %369
  %371 = vrot.lane.b32.xlu0 %v249, 96
  %v372 = vpop.permute.xlu0 %371
  %373 = vrot.lane.b32.xlu0 %v250, 96
  %v374 = vpop.permute.xlu0 %373
  %375 = vrot.lane.b32.xlu0 %v251, 96
  %v376 = vpop.permute.xlu0 %375
  %377 = vrot.lane.b32.xlu0 %v252, 96
  %v378 = vpop.permute.xlu0 %377
  %379 = vrot.lane.b32.xlu0 %v253, 96
  %v380 = vpop.permute.xlu0 %379
  %381 = vrot.lane.b32.xlu0 %v254, 96
  %v382 = vpop.permute.xlu0 %381
  %383 = vrot.lane.b32.xlu0 %v255, 96
  %v384 = vpop.permute.xlu0 %383
  %417 = vst.msk [vmem:[%s4] sm:$0xf] %vm256, %v322
  %418 = vst.msk [vmem:[%s4 + $0x4] sm:$0xf] %vm256, %v324
  %419 = vst.msk [vmem:[%s4 + $0x8] sm:$0xf] %vm256, %v326
  %420 = vst.msk [vmem:[%s4 + $0xc] sm:$0xf] %vm256, %v328
  %421 = vst.msk [vmem:[%s4 + $0x10] sm:$0xf] %vm256, %v330
  %422 = vst.msk [vmem:[%s4 + $0x14] sm:$0xf] %vm256, %v332
  %423 = vst.msk [vmem:[%s4 + $0x18] sm:$0xf] %vm256, %v334
  %424 = vst.msk [vmem:[%s4 + $0x1c] sm:$0xf] %vm256, %v336
  %425 = vst.msk [vmem:[%s4 + $0x20] sm:$0xf] %vm256, %v338
  %426 = vst.msk [vmem:[%s4 + $0x24] sm:$0xf] %vm256, %v340
  %427 = vst.msk [vmem:[%s4 + $0x28] sm:$0xf] %vm256, %v342
  %428 = vst.msk [vmem:[%s4 + $0x2c] sm:$0xf] %vm256, %v344
  %429 = vst.msk [vmem:[%s4 + $0x30] sm:$0xf] %vm256, %v346
  %430 = vst.msk [vmem:[%s4 + $0x34] sm:$0xf] %vm256, %v348
  %431 = vst.msk [vmem:[%s4 + $0x38] sm:$0xf] %vm256, %v350
  %432 = vst.msk [vmem:[%s4 + $0x3c] sm:$0xf] %vm256, %v352
  %433 = vst.msk [vmem:[%s4 + $0x40] sm:$0xf] %vm256, %v354
  %434 = vst.msk [vmem:[%s4 + $0x44] sm:$0xf] %vm256, %v356
  %435 = vst.msk [vmem:[%s4 + $0x48] sm:$0xf] %vm256, %v358
  %436 = vst.msk [vmem:[%s4 + $0x4c] sm:$0xf] %vm256, %v360
  %437 = vst.msk [vmem:[%s4 + $0x50] sm:$0xf] %vm256, %v362
  %438 = vst.msk [vmem:[%s4 + $0x54] sm:$0xf] %vm256, %v364
  %439 = vst.msk [vmem:[%s4 + $0x58] sm:$0xf] %vm256, %v366
  %440 = vst.msk [vmem:[%s4 + $0x5c] sm:$0xf] %vm256, %v368
  %441 = vst.msk [vmem:[%s4 + $0x60] sm:$0xf] %vm256, %v370
  %442 = vst.msk [vmem:[%s4 + $0x64] sm:$0xf] %vm256, %v372
  %443 = vst.msk [vmem:[%s4 + $0x68] sm:$0xf] %vm256, %v374
  %444 = vst.msk [vmem:[%s4 + $0x6c] sm:$0xf] %vm256, %v376
  %445 = vst.msk [vmem:[%s4 + $0x70] sm:$0xf] %vm256, %v378
  %446 = vst.msk [vmem:[%s4 + $0x74] sm:$0xf] %vm256, %v380
  %447 = vst.msk [vmem:[%s4 + $0x78] sm:$0xf] %vm256, %v382
  %448 = vst.msk [vmem:[%s4 + $0x7c] sm:$0xf] %vm256, %v384
  %449 = vrot.lane.b32.xlu0 %v224, 64
  %v450 = vpop.permute.xlu0 %449
  %451 = vrot.lane.b32.xlu0 %v225, 64
  %v452 = vpop.permute.xlu0 %451
  %453 = vrot.lane.b32.xlu0 %v226, 64
  %v454 = vpop.permute.xlu0 %453
  %455 = vrot.lane.b32.xlu0 %v227, 64
  %v456 = vpop.permute.xlu0 %455
  %457 = vrot.lane.b32.xlu0 %v228, 64
  %v458 = vpop.permute.xlu0 %457
  %459 = vrot.lane.b32.xlu0 %v229, 64
  %v460 = vpop.permute.xlu0 %459
  %461 = vrot.lane.b32.xlu0 %v230, 64
  %v462 = vpop.permute.xlu0 %461
  %463 = vrot.lane.b32.xlu0 %v231, 64
  %v464 = vpop.permute.xlu0 %463
  %465 = vrot.lane.b32.xlu0 %v232, 64
  %v466 = vpop.permute.xlu0 %465
  %467 = vrot.lane.b32.xlu0 %v233, 64
  %v468 = vpop.permute.xlu0 %467
  %469 = vrot.lane.b32.xlu0 %v234, 64
  %v470 = vpop.permute.xlu0 %469
  %471 = vrot.lane.b32.xlu0 %v235, 64
  %v472 = vpop.permute.xlu0 %471
  %473 = vrot.lane.b32.xlu0 %v236, 64
  %v474 = vpop.permute.xlu0 %473
  %475 = vrot.lane.b32.xlu0 %v237, 64
  %v476 = vpop.permute.xlu0 %475
  %477 = vrot.lane.b32.xlu0 %v238, 64
  %v478 = vpop.permute.xlu0 %477
  %479 = vrot.lane.b32.xlu0 %v239, 64
  %v480 = vpop.permute.xlu0 %479
  %481 = vrot.lane.b32.xlu0 %v240, 64
  %v482 = vpop.permute.xlu0 %481
  %483 = vrot.lane.b32.xlu0 %v241, 64
  %v484 = vpop.permute.xlu0 %483
  %485 = vrot.lane.b32.xlu0 %v242, 64
  %v486 = vpop.permute.xlu0 %485
  %487 = vrot.lane.b32.xlu0 %v243, 64
  %v488 = vpop.permute.xlu0 %487
  %489 = vrot.lane.b32.xlu0 %v244, 64
  %v490 = vpop.permute.xlu0 %489
  %491 = vrot.lane.b32.xlu0 %v245, 64
  %v492 = vpop.permute.xlu0 %491
  %493 = vrot.lane.b32.xlu0 %v246, 64
  %v494 = vpop.permute.xlu0 %493
  %495 = vrot.lane.b32.xlu0 %v247, 64
  %v496 = vpop.permute.xlu0 %495
  %497 = vrot.lane.b32.xlu0 %v248, 64
  %v498 = vpop.permute.xlu0 %497
  %499 = vrot.lane.b32.xlu0 %v249, 64
  %v500 = vpop.permute.xlu0 %499
  %501 = vrot.lane.b32.xlu0 %v250, 64
  %v502 = vpop.permute.xlu0 %501
  %503 = vrot.lane.b32.xlu0 %v251, 64
  %v504 = vpop.permute.xlu0 %503
  %505 = vrot.lane.b32.xlu0 %v252, 64
  %v506 = vpop.permute.xlu0 %505
  %507 = vrot.lane.b32.xlu0 %v253, 64
  %v508 = vpop.permute.xlu0 %507
  %509 = vrot.lane.b32.xlu0 %v254, 64
  %v510 = vpop.permute.xlu0 %509
  %511 = vrot.lane.b32.xlu0 %v255, 64
  %v512 = vpop.permute.xlu0 %511
  %545 = vst.msk [vmem:[%s5] sm:$0xf] %vm256, %v450
  %546 = vst.msk [vmem:[%s5 + $0x4] sm:$0xf] %vm256, %v452
  %547 = vst.msk [vmem:[%s5 + $0x8] sm:$0xf] %vm256, %v454
  %548 = vst.msk [vmem:[%s5 + $0xc] sm:$0xf] %vm256, %v456
  %549 = vst.msk [vmem:[%s5 + $0x10] sm:$0xf] %vm256, %v458
  %550 = vst.msk [vmem:[%s5 + $0x14] sm:$0xf] %vm256, %v460
  %551 = vst.msk [vmem:[%s5 + $0x18] sm:$0xf] %vm256, %v462
  %552 = vst.msk [vmem:[%s5 + $0x1c] sm:$0xf] %vm256, %v464
  %553 = vst.msk [vmem:[%s5 + $0x20] sm:$0xf] %vm256, %v466
  %554 = vst.msk [vmem:[%s5 + $0x24] sm:$0xf] %vm256, %v468
  %555 = vst.msk [vmem:[%s5 + $0x28] sm:$0xf] %vm256, %v470
  %556 = vst.msk [vmem:[%s5 + $0x2c] sm:$0xf] %vm256, %v472
  %557 = vst.msk [vmem:[%s5 + $0x30] sm:$0xf] %vm256, %v474
  %558 = vst.msk [vmem:[%s5 + $0x34] sm:$0xf] %vm256, %v476
  %559 = vst.msk [vmem:[%s5 + $0x38] sm:$0xf] %vm256, %v478
  %560 = vst.msk [vmem:[%s5 + $0x3c] sm:$0xf] %vm256, %v480
  %561 = vst.msk [vmem:[%s5 + $0x40] sm:$0xf] %vm256, %v482
  %562 = vst.msk [vmem:[%s5 + $0x44] sm:$0xf] %vm256, %v484
  %563 = vst.msk [vmem:[%s5 + $0x48] sm:$0xf] %vm256, %v486
  %564 = vst.msk [vmem:[%s5 + $0x4c] sm:$0xf] %vm256, %v488
  %565 = vst.msk [vmem:[%s5 + $0x50] sm:$0xf] %vm256, %v490
  %566 = vst.msk [vmem:[%s5 + $0x54] sm:$0xf] %vm256, %v492
  %567 = vst.msk [vmem:[%s5 + $0x58] sm:$0xf] %vm256, %v494
  %568 = vst.msk [vmem:[%s5 + $0x5c] sm:$0xf] %vm256, %v496
  %569 = vst.msk [vmem:[%s5 + $0x60] sm:$0xf] %vm256, %v498
  %570 = vst.msk [vmem:[%s5 + $0x64] sm:$0xf] %vm256, %v500
  %571 = vst.msk [vmem:[%s5 + $0x68] sm:$0xf] %vm256, %v502
  %572 = vst.msk [vmem:[%s5 + $0x6c] sm:$0xf] %vm256, %v504
  %573 = vst.msk [vmem:[%s5 + $0x70] sm:$0xf] %vm256, %v506
  %574 = vst.msk [vmem:[%s5 + $0x74] sm:$0xf] %vm256, %v508
  %575 = vst.msk [vmem:[%s5 + $0x78] sm:$0xf] %vm256, %v510
  %576 = vst.msk [vmem:[%s5 + $0x7c] sm:$0xf] %vm256, %v512
  %577 = vrot.lane.b32.xlu0 %v224, 120
  %v578 = vpop.permute.xlu0 %577
  %579 = vrot.lane.b32.xlu0 %v225, 120
  %v580 = vpop.permute.xlu0 %579
  %581 = vrot.lane.b32.xlu0 %v226, 120
  %v582 = vpop.permute.xlu0 %581
  %583 = vrot.lane.b32.xlu0 %v227, 120
  %v584 = vpop.permute.xlu0 %583
  %585 = vrot.lane.b32.xlu0 %v228, 120
  %v586 = vpop.permute.xlu0 %585
  %587 = vrot.lane.b32.xlu0 %v229, 120
  %v588 = vpop.permute.xlu0 %587
  %589 = vrot.lane.b32.xlu0 %v230, 120
  %v590 = vpop.permute.xlu0 %589
  %591 = vrot.lane.b32.xlu0 %v231, 120
  %v592 = vpop.permute.xlu0 %591
  %593 = vrot.lane.b32.xlu0 %v232, 120
  %v594 = vpop.permute.xlu0 %593
  %595 = vrot.lane.b32.xlu0 %v233, 120
  %v596 = vpop.permute.xlu0 %595
  %597 = vrot.lane.b32.xlu0 %v234, 120
  %v598 = vpop.permute.xlu0 %597
  %599 = vrot.lane.b32.xlu0 %v235, 120
  %v600 = vpop.permute.xlu0 %599
  %601 = vrot.lane.b32.xlu0 %v236, 120
  %v602 = vpop.permute.xlu0 %601
  %603 = vrot.lane.b32.xlu0 %v237, 120
  %v604 = vpop.permute.xlu0 %603
  %605 = vrot.lane.b32.xlu0 %v238, 120
  %v606 = vpop.permute.xlu0 %605
  %607 = vrot.lane.b32.xlu0 %v239, 120
  %v608 = vpop.permute.xlu0 %607
  %609 = vrot.lane.b32.xlu0 %v240, 120
  %v610 = vpop.permute.xlu0 %609
  %611 = vrot.lane.b32.xlu0 %v241, 120
  %v612 = vpop.permute.xlu0 %611
  %613 = vrot.lane.b32.xlu0 %v242, 120
  %v614 = vpop.permute.xlu0 %613
  %615 = vrot.lane.b32.xlu0 %v243, 120
  %v616 = vpop.permute.xlu0 %615
  %617 = vrot.lane.b32.xlu0 %v244, 120
  %v618 = vpop.permute.xlu0 %617
  %619 = vrot.lane.b32.xlu0 %v245, 120
  %v620 = vpop.permute.xlu0 %619
  %621 = vrot.lane.b32.xlu0 %v246, 120
  %v622 = vpop.permute.xlu0 %621
  %623 = vrot.lane.b32.xlu0 %v247, 120
  %v624 = vpop.permute.xlu0 %623
  %625 = vrot.lane.b32.xlu0 %v248, 120
  %v626 = vpop.permute.xlu0 %625
  %627 = vrot.lane.b32.xlu0 %v249, 120
  %v628 = vpop.permute.xlu0 %627
  %629 = vrot.lane.b32.xlu0 %v250, 120
  %v630 = vpop.permute.xlu0 %629
  %631 = vrot.lane.b32.xlu0 %v251, 120
  %v632 = vpop.permute.xlu0 %631
  %633 = vrot.lane.b32.xlu0 %v252, 120
  %v634 = vpop.permute.xlu0 %633
  %635 = vrot.lane.b32.xlu0 %v253, 120
  %v636 = vpop.permute.xlu0 %635
  %637 = vrot.lane.b32.xlu0 %v254, 120
  %v638 = vpop.permute.xlu0 %637
  %639 = vrot.lane.b32.xlu0 %v255, 120
  %v640 = vpop.permute.xlu0 %639
  %s673 = scalar_lea.vmem %s3, 128
  %674 = vst.msk [vmem:[%s673] sm:$0xf] %vm256, %v578
  %675 = vst.msk [vmem:[%s673 + $0x4] sm:$0xf] %vm256, %v580
  %676 = vst.msk [vmem:[%s673 + $0x8] sm:$0xf] %vm256, %v582
  %677 = vst.msk [vmem:[%s673 + $0xc] sm:$0xf] %vm256, %v584
  %678 = vst.msk [vmem:[%s673 + $0x10] sm:$0xf] %vm256, %v586
  %679 = vst.msk [vmem:[%s673 + $0x14] sm:$0xf] %vm256, %v588
  %680 = vst.msk [vmem:[%s673 + $0x18] sm:$0xf] %vm256, %v590
  %681 = vst.msk [vmem:[%s673 + $0x1c] sm:$0xf] %vm256, %v592
  %682 = vst.msk [vmem:[%s673 + $0x20] sm:$0xf] %vm256, %v594
  %683 = vst.msk [vmem:[%s673 + $0x24] sm:$0xf] %vm256, %v596
  %684 = vst.msk [vmem:[%s673 + $0x28] sm:$0xf] %vm256, %v598
  %685 = vst.msk [vmem:[%s673 + $0x2c] sm:$0xf] %vm256, %v600
  %686 = vst.msk [vmem:[%s673 + $0x30] sm:$0xf] %vm256, %v602
  %687 = vst.msk [vmem:[%s673 + $0x34] sm:$0xf] %vm256, %v604
  %688 = vst.msk [vmem:[%s673 + $0x38] sm:$0xf] %vm256, %v606
  %689 = vst.msk [vmem:[%s673 + $0x3c] sm:$0xf] %vm256, %v608
  %690 = vst.msk [vmem:[%s673 + $0x40] sm:$0xf] %vm256, %v610
  %691 = vst.msk [vmem:[%s673 + $0x44] sm:$0xf] %vm256, %v612
  %692 = vst.msk [vmem:[%s673 + $0x48] sm:$0xf] %vm256, %v614
  %693 = vst.msk [vmem:[%s673 + $0x4c] sm:$0xf] %vm256, %v616
  %694 = vst.msk [vmem:[%s673 + $0x50] sm:$0xf] %vm256, %v618
  %695 = vst.msk [vmem:[%s673 + $0x54] sm:$0xf] %vm256, %v620
  %696 = vst.msk [vmem:[%s673 + $0x58] sm:$0xf] %vm256, %v622
  %697 = vst.msk [vmem:[%s673 + $0x5c] sm:$0xf] %vm256, %v624
  %698 = vst.msk [vmem:[%s673 + $0x60] sm:$0xf] %vm256, %v626
  %699 = vst.msk [vmem:[%s673 + $0x64] sm:$0xf] %vm256, %v628
  %700 = vst.msk [vmem:[%s673 + $0x68] sm:$0xf] %vm256, %v630
  %701 = vst.msk [vmem:[%s673 + $0x6c] sm:$0xf] %vm256, %v632
  %702 = vst.msk [vmem:[%s673 + $0x70] sm:$0xf] %vm256, %v634
  %703 = vst.msk [vmem:[%s673 + $0x74] sm:$0xf] %vm256, %v636
  %704 = vst.msk [vmem:[%s673 + $0x78] sm:$0xf] %vm256, %v638
  %705 = vst.msk [vmem:[%s673 + $0x7c] sm:$0xf] %vm256, %v640
  %706 = vrot.lane.b32.xlu0 %v224, 88
  %v707 = vpop.permute.xlu0 %706
  %708 = vrot.lane.b32.xlu0 %v225, 88
  %v709 = vpop.permute.xlu0 %708
  %710 = vrot.lane.b32.xlu0 %v226, 88
  %v711 = vpop.permute.xlu0 %710
  %712 = vrot.lane.b32.xlu0 %v227, 88
  %v713 = vpop.permute.xlu0 %712
  %714 = vrot.lane.b32.xlu0 %v228, 88
  %v715 = vpop.permute.xlu0 %714
  %716 = vrot.lane.b32.xlu0 %v229, 88
  %v717 = vpop.permute.xlu0 %716
  %718 = vrot.lane.b32.xlu0 %v230, 88
  %v719 = vpop.permute.xlu0 %718
  %720 = vrot.lane.b32.xlu0 %v231, 88
  %v721 = vpop.permute.xlu0 %720
  %722 = vrot.lane.b32.xlu0 %v232, 88
  %v723 = vpop.permute.xlu0 %722
  %724 = vrot.lane.b32.xlu0 %v233, 88
  %v725 = vpop.permute.xlu0 %724
  %726 = vrot.lane.b32.xlu0 %v234, 88
  %v727 = vpop.permute.xlu0 %726
  %728 = vrot.lane.b32.xlu0 %v235, 88
  %v729 = vpop.permute.xlu0 %728
  %730 = vrot.lane.b32.xlu0 %v236, 88
  %v731 = vpop.permute.xlu0 %730
  %732 = vrot.lane.b32.xlu0 %v237, 88
  %v733 = vpop.permute.xlu0 %732
  %734 = vrot.lane.b32.xlu0 %v238, 88
  %v735 = vpop.permute.xlu0 %734
  %736 = vrot.lane.b32.xlu0 %v239, 88
  %v737 = vpop.permute.xlu0 %736
  %738 = vrot.lane.b32.xlu0 %v240, 88
  %v739 = vpop.permute.xlu0 %738
  %740 = vrot.lane.b32.xlu0 %v241, 88
  %v741 = vpop.permute.xlu0 %740
  %742 = vrot.lane.b32.xlu0 %v242, 88
  %v743 = vpop.permute.xlu0 %742
  %744 = vrot.lane.b32.xlu0 %v243, 88
  %v745 = vpop.permute.xlu0 %744
  %746 = vrot.lane.b32.xlu0 %v244, 88
  %v747 = vpop.permute.xlu0 %746
  %748 = vrot.lane.b32.xlu0 %v245, 88
  %v749 = vpop.permute.xlu0 %748
  %750 = vrot.lane.b32.xlu0 %v246, 88
  %v751 = vpop.permute.xlu0 %750
  %752 = vrot.lane.b32.xlu0 %v247, 88
  %v753 = vpop.permute.xlu0 %752
  %754 = vrot.lane.b32.xlu0 %v248, 88
  %v755 = vpop.permute.xlu0 %754
  %756 = vrot.lane.b32.xlu0 %v249, 88
  %v757 = vpop.permute.xlu0 %756
  %758 = vrot.lane.b32.xlu0 %v250, 88
  %v759 = vpop.permute.xlu0 %758
  %760 = vrot.lane.b32.xlu0 %v251, 88
  %v761 = vpop.permute.xlu0 %760
  %762 = vrot.lane.b32.xlu0 %v252, 88
  %v763 = vpop.permute.xlu0 %762
  %764 = vrot.lane.b32.xlu0 %v253, 88
  %v765 = vpop.permute.xlu0 %764
  %766 = vrot.lane.b32.xlu0 %v254, 88
  %v767 = vpop.permute.xlu0 %766
  %768 = vrot.lane.b32.xlu0 %v255, 88
  %v769 = vpop.permute.xlu0 %768
  %s802 = scalar_lea.vmem %s4, 128
  %803 = vst.msk [vmem:[%s802] sm:$0xf] %vm256, %v707
  %804 = vst.msk [vmem:[%s802 + $0x4] sm:$0xf] %vm256, %v709
  %805 = vst.msk [vmem:[%s802 + $0x8] sm:$0xf] %vm256, %v711
  %806 = vst.msk [vmem:[%s802 + $0xc] sm:$0xf] %vm256, %v713
  %807 = vst.msk [vmem:[%s802 + $0x10] sm:$0xf] %vm256, %v715
  %808 = vst.msk [vmem:[%s802 + $0x14] sm:$0xf] %vm256, %v717
  %809 = vst.msk [vmem:[%s802 + $0x18] sm:$0xf] %vm256, %v719
  %810 = vst.msk [vmem:[%s802 + $0x1c] sm:$0xf] %vm256, %v721
  %811 = vst.msk [vmem:[%s802 + $0x20] sm:$0xf] %vm256, %v723
  %812 = vst.msk [vmem:[%s802 + $0x24] sm:$0xf] %vm256, %v725
  %813 = vst.msk [vmem:[%s802 + $0x28] sm:$0xf] %vm256, %v727
  %814 = vst.msk [vmem:[%s802 + $0x2c] sm:$0xf] %vm256, %v729
  %815 = vst.msk [vmem:[%s802 + $0x30] sm:$0xf] %vm256, %v731
  %816 = vst.msk [vmem:[%s802 + $0x34] sm:$0xf] %vm256, %v733
  %817 = vst.msk [vmem:[%s802 + $0x38] sm:$0xf] %vm256, %v735
  %818 = vst.msk [vmem:[%s802 + $0x3c] sm:$0xf] %vm256, %v737
  %819 = vst.msk [vmem:[%s802 + $0x40] sm:$0xf] %vm256, %v739
  %820 = vst.msk [vmem:[%s802 + $0x44] sm:$0xf] %vm256, %v741
  %821 = vst.msk [vmem:[%s802 + $0x48] sm:$0xf] %vm256, %v743
  %822 = vst.msk [vmem:[%s802 + $0x4c] sm:$0xf] %vm256, %v745
  %823 = vst.msk [vmem:[%s802 + $0x50] sm:$0xf] %vm256, %v747
  %824 = vst.msk [vmem:[%s802 + $0x54] sm:$0xf] %vm256, %v749
  %825 = vst.msk [vmem:[%s802 + $0x58] sm:$0xf] %vm256, %v751
  %826 = vst.msk [vmem:[%s802 + $0x5c] sm:$0xf] %vm256, %v753
  %827 = vst.msk [vmem:[%s802 + $0x60] sm:$0xf] %vm256, %v755
  %828 = vst.msk [vmem:[%s802 + $0x64] sm:$0xf] %vm256, %v757
  %829 = vst.msk [vmem:[%s802 + $0x68] sm:$0xf] %vm256, %v759
  %830 = vst.msk [vmem:[%s802 + $0x6c] sm:$0xf] %vm256, %v761
  %831 = vst.msk [vmem:[%s802 + $0x70] sm:$0xf] %vm256, %v763
  %832 = vst.msk [vmem:[%s802 + $0x74] sm:$0xf] %vm256, %v765
  %833 = vst.msk [vmem:[%s802 + $0x78] sm:$0xf] %vm256, %v767
  %834 = vst.msk [vmem:[%s802 + $0x7c] sm:$0xf] %vm256, %v769
  %835 = vrot.lane.b32.xlu0 %v224, 56
  %v836 = vpop.permute.xlu0 %835
  %837 = vrot.lane.b32.xlu0 %v225, 56
  %v838 = vpop.permute.xlu0 %837
  %839 = vrot.lane.b32.xlu0 %v226, 56
  %v840 = vpop.permute.xlu0 %839
  %841 = vrot.lane.b32.xlu0 %v227, 56
  %v842 = vpop.permute.xlu0 %841
  %843 = vrot.lane.b32.xlu0 %v228, 56
  %v844 = vpop.permute.xlu0 %843
  %845 = vrot.lane.b32.xlu0 %v229, 56
  %v846 = vpop.permute.xlu0 %845
  %847 = vrot.lane.b32.xlu0 %v230, 56
  %v848 = vpop.permute.xlu0 %847
  %849 = vrot.lane.b32.xlu0 %v231, 56
  %v850 = vpop.permute.xlu0 %849
  %851 = vrot.lane.b32.xlu0 %v232, 56
  %v852 = vpop.permute.xlu0 %851
  %853 = vrot.lane.b32.xlu0 %v233, 56
  %v854 = vpop.permute.xlu0 %853
  %855 = vrot.lane.b32.xlu0 %v234, 56
  %v856 = vpop.permute.xlu0 %855
  %857 = vrot.lane.b32.xlu0 %v235, 56
  %v858 = vpop.permute.xlu0 %857
  %859 = vrot.lane.b32.xlu0 %v236, 56
  %v860 = vpop.permute.xlu0 %859
  %861 = vrot.lane.b32.xlu0 %v237, 56
  %v862 = vpop.permute.xlu0 %861
  %863 = vrot.lane.b32.xlu0 %v238, 56
  %v864 = vpop.permute.xlu0 %863
  %865 = vrot.lane.b32.xlu0 %v239, 56
  %v866 = vpop.permute.xlu0 %865
  %867 = vrot.lane.b32.xlu0 %v240, 56
  %v868 = vpop.permute.xlu0 %867
  %869 = vrot.lane.b32.xlu0 %v241, 56
  %v870 = vpop.permute.xlu0 %869
  %871 = vrot.lane.b32.xlu0 %v242, 56
  %v872 = vpop.permute.xlu0 %871
  %873 = vrot.lane.b32.xlu0 %v243, 56
  %v874 = vpop.permute.xlu0 %873
  %875 = vrot.lane.b32.xlu0 %v244, 56
  %v876 = vpop.permute.xlu0 %875
  %877 = vrot.lane.b32.xlu0 %v245, 56
  %v878 = vpop.permute.xlu0 %877
  %879 = vrot.lane.b32.xlu0 %v246, 56
  %v880 = vpop.permute.xlu0 %879
  %881 = vrot.lane.b32.xlu0 %v247, 56
  %v882 = vpop.permute.xlu0 %881
  %883 = vrot.lane.b32.xlu0 %v248, 56
  %v884 = vpop.permute.xlu0 %883
  %885 = vrot.lane.b32.xlu0 %v249, 56
  %v886 = vpop.permute.xlu0 %885
  %887 = vrot.lane.b32.xlu0 %v250, 56
  %v888 = vpop.permute.xlu0 %887
  %889 = vrot.lane.b32.xlu0 %v251, 56
  %v890 = vpop.permute.xlu0 %889
  %891 = vrot.lane.b32.xlu0 %v252, 56
  %v892 = vpop.permute.xlu0 %891
  %893 = vrot.lane.b32.xlu0 %v253, 56
  %v894 = vpop.permute.xlu0 %893
  %895 = vrot.lane.b32.xlu0 %v254, 56
  %v896 = vpop.permute.xlu0 %895
  %897 = vrot.lane.b32.xlu0 %v255, 56
  %v898 = vpop.permute.xlu0 %897
  %s931 = scalar_lea.vmem %s5, 128
  %932 = vst.msk [vmem:[%s931] sm:$0xf] %vm256, %v836
  %933 = vst.msk [vmem:[%s931 + $0x4] sm:$0xf] %vm256, %v838
  %934 = vst.msk [vmem:[%s931 + $0x8] sm:$0xf] %vm256, %v840
  %935 = vst.msk [vmem:[%s931 + $0xc] sm:$0xf] %vm256, %v842
  %936 = vst.msk [vmem:[%s931 + $0x10] sm:$0xf] %vm256, %v844
  %937 = vst.msk [vmem:[%s931 + $0x14] sm:$0xf] %vm256, %v846
  %938 = vst.msk [vmem:[%s931 + $0x18] sm:$0xf] %vm256, %v848
  %939 = vst.msk [vmem:[%s931 + $0x1c] sm:$0xf] %vm256, %v850
  %940 = vst.msk [vmem:[%s931 + $0x20] sm:$0xf] %vm256, %v852
  %941 = vst.msk [vmem:[%s931 + $0x24] sm:$0xf] %vm256, %v854
  %942 = vst.msk [vmem:[%s931 + $0x28] sm:$0xf] %vm256, %v856
  %943 = vst.msk [vmem:[%s931 + $0x2c] sm:$0xf] %vm256, %v858
  %944 = vst.msk [vmem:[%s931 + $0x30] sm:$0xf] %vm256, %v860
  %945 = vst.msk [vmem:[%s931 + $0x34] sm:$0xf] %vm256, %v862
  %946 = vst.msk [vmem:[%s931 + $0x38] sm:$0xf] %vm256, %v864
  %947 = vst.msk [vmem:[%s931 + $0x3c] sm:$0xf] %vm256, %v866
  %948 = vst.msk [vmem:[%s931 + $0x40] sm:$0xf] %vm256, %v868
  %949 = vst.msk [vmem:[%s931 + $0x44] sm:$0xf] %vm256, %v870
  %950 = vst.msk [vmem:[%s931 + $0x48] sm:$0xf] %vm256, %v872
  %951 = vst.msk [vmem:[%s931 + $0x4c] sm:$0xf] %vm256, %v874
  %952 = vst.msk [vmem:[%s931 + $0x50] sm:$0xf] %vm256, %v876
  %953 = vst.msk [vmem:[%s931 + $0x54] sm:$0xf] %vm256, %v878
  %954 = vst.msk [vmem:[%s931 + $0x58] sm:$0xf] %vm256, %v880
  %955 = vst.msk [vmem:[%s931 + $0x5c] sm:$0xf] %vm256, %v882
  %956 = vst.msk [vmem:[%s931 + $0x60] sm:$0xf] %vm256, %v884
  %957 = vst.msk [vmem:[%s931 + $0x64] sm:$0xf] %vm256, %v886
  %958 = vst.msk [vmem:[%s931 + $0x68] sm:$0xf] %vm256, %v888
  %959 = vst.msk [vmem:[%s931 + $0x6c] sm:$0xf] %vm256, %v890
  %960 = vst.msk [vmem:[%s931 + $0x70] sm:$0xf] %vm256, %v892
  %961 = vst.msk [vmem:[%s931 + $0x74] sm:$0xf] %vm256, %v894
  %962 = vst.msk [vmem:[%s931 + $0x78] sm:$0xf] %vm256, %v896
  %963 = vst.msk [vmem:[%s931 + $0x7c] sm:$0xf] %vm256, %v898
  %964 = vrot.lane.b32.xlu0 %v224, 112
  %v965 = vpop.permute.xlu0 %964
  %966 = vrot.lane.b32.xlu0 %v225, 112
  %v967 = vpop.permute.xlu0 %966
  %968 = vrot.lane.b32.xlu0 %v226, 112
  %v969 = vpop.permute.xlu0 %968
  %970 = vrot.lane.b32.xlu0 %v227, 112
  %v971 = vpop.permute.xlu0 %970
  %972 = vrot.lane.b32.xlu0 %v228, 112
  %v973 = vpop.permute.xlu0 %972
  %974 = vrot.lane.b32.xlu0 %v229, 112
  %v975 = vpop.permute.xlu0 %974
  %976 = vrot.lane.b32.xlu0 %v230, 112
  %v977 = vpop.permute.xlu0 %976
  %978 = vrot.lane.b32.xlu0 %v231, 112
  %v979 = vpop.permute.xlu0 %978
  %980 = vrot.lane.b32.xlu0 %v232, 112
  %v981 = vpop.permute.xlu0 %980
  %982 = vrot.lane.b32.xlu0 %v233, 112
  %v983 = vpop.permute.xlu0 %982
  %984 = vrot.lane.b32.xlu0 %v234, 112
  %v985 = vpop.permute.xlu0 %984
  %986 = vrot.lane.b32.xlu0 %v235, 112
  %v987 = vpop.permute.xlu0 %986
  %988 = vrot.lane.b32.xlu0 %v236, 112
  %v989 = vpop.permute.xlu0 %988
  %990 = vrot.lane.b32.xlu0 %v237, 112
  %v991 = vpop.permute.xlu0 %990
  %992 = vrot.lane.b32.xlu0 %v238, 112
  %v993 = vpop.permute.xlu0 %992
  %994 = vrot.lane.b32.xlu0 %v239, 112
  %v995 = vpop.permute.xlu0 %994
  %996 = vrot.lane.b32.xlu0 %v240, 112
  %v997 = vpop.permute.xlu0 %996
  %998 = vrot.lane.b32.xlu0 %v241, 112
  %v999 = vpop.permute.xlu0 %998
  %1000 = vrot.lane.b32.xlu0 %v242, 112
  %v1001 = vpop.permute.xlu0 %1000
  %1002 = vrot.lane.b32.xlu0 %v243, 112
  %v1003 = vpop.permute.xlu0 %1002
  %1004 = vrot.lane.b32.xlu0 %v244, 112
  %v1005 = vpop.permute.xlu0 %1004
  %1006 = vrot.lane.b32.xlu0 %v245, 112
  %v1007 = vpop.permute.xlu0 %1006
  %1008 = vrot.lane.b32.xlu0 %v246, 112
  %v1009 = vpop.permute.xlu0 %1008
  %1010 = vrot.lane.b32.xlu0 %v247, 112
  %v1011 = vpop.permute.xlu0 %1010
  %1012 = vrot.lane.b32.xlu0 %v248, 112
  %v1013 = vpop.permute.xlu0 %1012
  %1014 = vrot.lane.b32.xlu0 %v249, 112
  %v1015 = vpop.permute.xlu0 %1014
  %1016 = vrot.lane.b32.xlu0 %v250, 112
  %v1017 = vpop.permute.xlu0 %1016
  %1018 = vrot.lane.b32.xlu0 %v251, 112
  %v1019 = vpop.permute.xlu0 %1018
  %1020 = vrot.lane.b32.xlu0 %v252, 112
  %v1021 = vpop.permute.xlu0 %1020
  %1022 = vrot.lane.b32.xlu0 %v253, 112
  %v1023 = vpop.permute.xlu0 %1022
  %1024 = vrot.lane.b32.xlu0 %v254, 112
  %v1025 = vpop.permute.xlu0 %1024
  %1026 = vrot.lane.b32.xlu0 %v255, 112
  %v1027 = vpop.permute.xlu0 %1026
  %s1060 = scalar_lea.vmem %s3, 256
  %1061 = vst.msk [vmem:[%s1060] sm:$0xf] %vm256, %v965
  %1062 = vst.msk [vmem:[%s1060 + $0x4] sm:$0xf] %vm256, %v967
  %1063 = vst.msk [vmem:[%s1060 + $0x8] sm:$0xf] %vm256, %v969
  %1064 = vst.msk [vmem:[%s1060 + $0xc] sm:$0xf] %vm256, %v971
  %1065 = vst.msk [vmem:[%s1060 + $0x10] sm:$0xf] %vm256, %v973
  %1066 = vst.msk [vmem:[%s1060 + $0x14] sm:$0xf] %vm256, %v975
  %1067 = vst.msk [vmem:[%s1060 + $0x18] sm:$0xf] %vm256, %v977
  %1068 = vst.msk [vmem:[%s1060 + $0x1c] sm:$0xf] %vm256, %v979
  %1069 = vst.msk [vmem:[%s1060 + $0x20] sm:$0xf] %vm256, %v981
  %1070 = vst.msk [vmem:[%s1060 + $0x24] sm:$0xf] %vm256, %v983
  %1071 = vst.msk [vmem:[%s1060 + $0x28] sm:$0xf] %vm256, %v985
  %1072 = vst.msk [vmem:[%s1060 + $0x2c] sm:$0xf] %vm256, %v987
  %1073 = vst.msk [vmem:[%s1060 + $0x30] sm:$0xf] %vm256, %v989
  %1074 = vst.msk [vmem:[%s1060 + $0x34] sm:$0xf] %vm256, %v991
  %1075 = vst.msk [vmem:[%s1060 + $0x38] sm:$0xf] %vm256, %v993
  %1076 = vst.msk [vmem:[%s1060 + $0x3c] sm:$0xf] %vm256, %v995
  %1077 = vst.msk [vmem:[%s1060 + $0x40] sm:$0xf] %vm256, %v997
  %1078 = vst.msk [vmem:[%s1060 + $0x44] sm:$0xf] %vm256, %v999
  %1079 = vst.msk [vmem:[%s1060 + $0x48] sm:$0xf] %vm256, %v1001
  %1080 = vst.msk [vmem:[%s1060 + $0x4c] sm:$0xf] %vm256, %v1003
  %1081 = vst.msk [vmem:[%s1060 + $0x50] sm:$0xf] %vm256, %v1005
  %1082 = vst.msk [vmem:[%s1060 + $0x54] sm:$0xf] %vm256, %v1007
  %1083 = vst.msk [vmem:[%s1060 + $0x58] sm:$0xf] %vm256, %v1009
  %1084 = vst.msk [vmem:[%s1060 + $0x5c] sm:$0xf] %vm256, %v1011
  %1085 = vst.msk [vmem:[%s1060 + $0x60] sm:$0xf] %vm256, %v1013
  %1086 = vst.msk [vmem:[%s1060 + $0x64] sm:$0xf] %vm256, %v1015
  %1087 = vst.msk [vmem:[%s1060 + $0x68] sm:$0xf] %vm256, %v1017
  %1088 = vst.msk [vmem:[%s1060 + $0x6c] sm:$0xf] %vm256, %v1019
  %1089 = vst.msk [vmem:[%s1060 + $0x70] sm:$0xf] %vm256, %v1021
  %1090 = vst.msk [vmem:[%s1060 + $0x74] sm:$0xf] %vm256, %v1023
  %1091 = vst.msk [vmem:[%s1060 + $0x78] sm:$0xf] %vm256, %v1025
  %1092 = vst.msk [vmem:[%s1060 + $0x7c] sm:$0xf] %vm256, %v1027
  %1093 = vrot.lane.b32.xlu0 %v224, 80
  %v1094 = vpop.permute.xlu0 %1093
  %1095 = vrot.lane.b32.xlu0 %v225, 80
  %v1096 = vpop.permute.xlu0 %1095
  %1097 = vrot.lane.b32.xlu0 %v226, 80
  %v1098 = vpop.permute.xlu0 %1097
  %1099 = vrot.lane.b32.xlu0 %v227, 80
  %v1100 = vpop.permute.xlu0 %1099
  %1101 = vrot.lane.b32.xlu0 %v228, 80
  %v1102 = vpop.permute.xlu0 %1101
  %1103 = vrot.lane.b32.xlu0 %v229, 80
  %v1104 = vpop.permute.xlu0 %1103
  %1105 = vrot.lane.b32.xlu0 %v230, 80
  %v1106 = vpop.permute.xlu0 %1105
  %1107 = vrot.lane.b32.xlu0 %v231, 80
  %v1108 = vpop.permute.xlu0 %1107
  %1109 = vrot.lane.b32.xlu0 %v232, 80
  %v1110 = vpop.permute.xlu0 %1109
  %1111 = vrot.lane.b32.xlu0 %v233, 80
  %v1112 = vpop.permute.xlu0 %1111
  %1113 = vrot.lane.b32.xlu0 %v234, 80
  %v1114 = vpop.permute.xlu0 %1113
  %1115 = vrot.lane.b32.xlu0 %v235, 80
  %v1116 = vpop.permute.xlu0 %1115
  %1117 = vrot.lane.b32.xlu0 %v236, 80
  %v1118 = vpop.permute.xlu0 %1117
  %1119 = vrot.lane.b32.xlu0 %v237, 80
  %v1120 = vpop.permute.xlu0 %1119
  %1121 = vrot.lane.b32.xlu0 %v238, 80
  %v1122 = vpop.permute.xlu0 %1121
  %1123 = vrot.lane.b32.xlu0 %v239, 80
  %v1124 = vpop.permute.xlu0 %1123
  %1125 = vrot.lane.b32.xlu0 %v240, 80
  %v1126 = vpop.permute.xlu0 %1125
  %1127 = vrot.lane.b32.xlu0 %v241, 80
  %v1128 = vpop.permute.xlu0 %1127
  %1129 = vrot.lane.b32.xlu0 %v242, 80
  %v1130 = vpop.permute.xlu0 %1129
  %1131 = vrot.lane.b32.xlu0 %v243, 80
  %v1132 = vpop.permute.xlu0 %1131
  %1133 = vrot.lane.b32.xlu0 %v244, 80
  %v1134 = vpop.permute.xlu0 %1133
  %1135 = vrot.lane.b32.xlu0 %v245, 80
  %v1136 = vpop.permute.xlu0 %1135
  %1137 = vrot.lane.b32.xlu0 %v246, 80
  %v1138 = vpop.permute.xlu0 %1137
  %1139 = vrot.lane.b32.xlu0 %v247, 80
  %v1140 = vpop.permute.xlu0 %1139
  %1141 = vrot.lane.b32.xlu0 %v248, 80
  %v1142 = vpop.permute.xlu0 %1141
  %1143 = vrot.lane.b32.xlu0 %v249, 80
  %v1144 = vpop.permute.xlu0 %1143
  %1145 = vrot.lane.b32.xlu0 %v250, 80
  %v1146 = vpop.permute.xlu0 %1145
  %1147 = vrot.lane.b32.xlu0 %v251, 80
  %v1148 = vpop.permute.xlu0 %1147
  %1149 = vrot.lane.b32.xlu0 %v252, 80
  %v1150 = vpop.permute.xlu0 %1149
  %1151 = vrot.lane.b32.xlu0 %v253, 80
  %v1152 = vpop.permute.xlu0 %1151
  %1153 = vrot.lane.b32.xlu0 %v254, 80
  %v1154 = vpop.permute.xlu0 %1153
  %1155 = vrot.lane.b32.xlu0 %v255, 80
  %v1156 = vpop.permute.xlu0 %1155
  %s1189 = scalar_lea.vmem %s4, 256
  %1190 = vst.msk [vmem:[%s1189] sm:$0xf] %vm256, %v1094
  %1191 = vst.msk [vmem:[%s1189 + $0x4] sm:$0xf] %vm256, %v1096
  %1192 = vst.msk [vmem:[%s1189 + $0x8] sm:$0xf] %vm256, %v1098
  %1193 = vst.msk [vmem:[%s1189 + $0xc] sm:$0xf] %vm256, %v1100
  %1194 = vst.msk [vmem:[%s1189 + $0x10] sm:$0xf] %vm256, %v1102
  %1195 = vst.msk [vmem:[%s1189 + $0x14] sm:$0xf] %vm256, %v1104
  %1196 = vst.msk [vmem:[%s1189 + $0x18] sm:$0xf] %vm256, %v1106
  %1197 = vst.msk [vmem:[%s1189 + $0x1c] sm:$0xf] %vm256, %v1108
  %1198 = vst.msk [vmem:[%s1189 + $0x20] sm:$0xf] %vm256, %v1110
  %1199 = vst.msk [vmem:[%s1189 + $0x24] sm:$0xf] %vm256, %v1112
  %1200 = vst.msk [vmem:[%s1189 + $0x28] sm:$0xf] %vm256, %v1114
  %1201 = vst.msk [vmem:[%s1189 + $0x2c] sm:$0xf] %vm256, %v1116
  %1202 = vst.msk [vmem:[%s1189 + $0x30] sm:$0xf] %vm256, %v1118
  %1203 = vst.msk [vmem:[%s1189 + $0x34] sm:$0xf] %vm256, %v1120
  %1204 = vst.msk [vmem:[%s1189 + $0x38] sm:$0xf] %vm256, %v1122
  %1205 = vst.msk [vmem:[%s1189 + $0x3c] sm:$0xf] %vm256, %v1124
  %1206 = vst.msk [vmem:[%s1189 + $0x40] sm:$0xf] %vm256, %v1126
  %1207 = vst.msk [vmem:[%s1189 + $0x44] sm:$0xf] %vm256, %v1128
  %1208 = vst.msk [vmem:[%s1189 + $0x48] sm:$0xf] %vm256, %v1130
  %1209 = vst.msk [vmem:[%s1189 + $0x4c] sm:$0xf] %vm256, %v1132
  %1210 = vst.msk [vmem:[%s1189 + $0x50] sm:$0xf] %vm256, %v1134
  %1211 = vst.msk [vmem:[%s1189 + $0x54] sm:$0xf] %vm256, %v1136
  %1212 = vst.msk [vmem:[%s1189 + $0x58] sm:$0xf] %vm256, %v1138
  %1213 = vst.msk [vmem:[%s1189 + $0x5c] sm:$0xf] %vm256, %v1140
  %1214 = vst.msk [vmem:[%s1189 + $0x60] sm:$0xf] %vm256, %v1142
  %1215 = vst.msk [vmem:[%s1189 + $0x64] sm:$0xf] %vm256, %v1144
  %1216 = vst.msk [vmem:[%s1189 + $0x68] sm:$0xf] %vm256, %v1146
  %1217 = vst.msk [vmem:[%s1189 + $0x6c] sm:$0xf] %vm256, %v1148
  %1218 = vst.msk [vmem:[%s1189 + $0x70] sm:$0xf] %vm256, %v1150
  %1219 = vst.msk [vmem:[%s1189 + $0x74] sm:$0xf] %vm256, %v1152
  %1220 = vst.msk [vmem:[%s1189 + $0x78] sm:$0xf] %vm256, %v1154
  %1221 = vst.msk [vmem:[%s1189 + $0x7c] sm:$0xf] %vm256, %v1156
  %1222 = vrot.lane.b32.xlu0 %v224, 48
  %v1223 = vpop.permute.xlu0 %1222
  %1224 = vrot.lane.b32.xlu0 %v225, 48
  %v1225 = vpop.permute.xlu0 %1224
  %1226 = vrot.lane.b32.xlu0 %v226, 48
  %v1227 = vpop.permute.xlu0 %1226
  %1228 = vrot.lane.b32.xlu0 %v227, 48
  %v1229 = vpop.permute.xlu0 %1228
  %1230 = vrot.lane.b32.xlu0 %v228, 48
  %v1231 = vpop.permute.xlu0 %1230
  %1232 = vrot.lane.b32.xlu0 %v229, 48
  %v1233 = vpop.permute.xlu0 %1232
  %1234 = vrot.lane.b32.xlu0 %v230, 48
  %v1235 = vpop.permute.xlu0 %1234
  %1236 = vrot.lane.b32.xlu0 %v231, 48
  %v1237 = vpop.permute.xlu0 %1236
  %1238 = vrot.lane.b32.xlu0 %v232, 48
  %v1239 = vpop.permute.xlu0 %1238
  %1240 = vrot.lane.b32.xlu0 %v233, 48
  %v1241 = vpop.permute.xlu0 %1240
  %1242 = vrot.lane.b32.xlu0 %v234, 48
  %v1243 = vpop.permute.xlu0 %1242
  %1244 = vrot.lane.b32.xlu0 %v235, 48
  %v1245 = vpop.permute.xlu0 %1244
  %1246 = vrot.lane.b32.xlu0 %v236, 48
  %v1247 = vpop.permute.xlu0 %1246
  %1248 = vrot.lane.b32.xlu0 %v237, 48
  %v1249 = vpop.permute.xlu0 %1248
  %1250 = vrot.lane.b32.xlu0 %v238, 48
  %v1251 = vpop.permute.xlu0 %1250
  %1252 = vrot.lane.b32.xlu0 %v239, 48
  %v1253 = vpop.permute.xlu0 %1252
  %1254 = vrot.lane.b32.xlu0 %v240, 48
  %v1255 = vpop.permute.xlu0 %1254
  %1256 = vrot.lane.b32.xlu0 %v241, 48
  %v1257 = vpop.permute.xlu0 %1256
  %1258 = vrot.lane.b32.xlu0 %v242, 48
  %v1259 = vpop.permute.xlu0 %1258
  %1260 = vrot.lane.b32.xlu0 %v243, 48
  %v1261 = vpop.permute.xlu0 %1260
  %1262 = vrot.lane.b32.xlu0 %v244, 48
  %v1263 = vpop.permute.xlu0 %1262
  %1264 = vrot.lane.b32.xlu0 %v245, 48
  %v1265 = vpop.permute.xlu0 %1264
  %1266 = vrot.lane.b32.xlu0 %v246, 48
  %v1267 = vpop.permute.xlu0 %1266
  %1268 = vrot.lane.b32.xlu0 %v247, 48
  %v1269 = vpop.permute.xlu0 %1268
  %1270 = vrot.lane.b32.xlu0 %v248, 48
  %v1271 = vpop.permute.xlu0 %1270
  %1272 = vrot.lane.b32.xlu0 %v249, 48
  %v1273 = vpop.permute.xlu0 %1272
  %1274 = vrot.lane.b32.xlu0 %v250, 48
  %v1275 = vpop.permute.xlu0 %1274
  %1276 = vrot.lane.b32.xlu0 %v251, 48
  %v1277 = vpop.permute.xlu0 %1276
  %1278 = vrot.lane.b32.xlu0 %v252, 48
  %v1279 = vpop.permute.xlu0 %1278
  %1280 = vrot.lane.b32.xlu0 %v253, 48
  %v1281 = vpop.permute.xlu0 %1280
  %1282 = vrot.lane.b32.xlu0 %v254, 48
  %v1283 = vpop.permute.xlu0 %1282
  %1284 = vrot.lane.b32.xlu0 %v255, 48
  %v1285 = vpop.permute.xlu0 %1284
  %s1318 = scalar_lea.vmem %s5, 256
  %1319 = vst.msk [vmem:[%s1318] sm:$0xf] %vm256, %v1223
  %1320 = vst.msk [vmem:[%s1318 + $0x4] sm:$0xf] %vm256, %v1225
  %1321 = vst.msk [vmem:[%s1318 + $0x8] sm:$0xf] %vm256, %v1227
  %1322 = vst.msk [vmem:[%s1318 + $0xc] sm:$0xf] %vm256, %v1229
  %1323 = vst.msk [vmem:[%s1318 + $0x10] sm:$0xf] %vm256, %v1231
  %1324 = vst.msk [vmem:[%s1318 + $0x14] sm:$0xf] %vm256, %v1233
  %1325 = vst.msk [vmem:[%s1318 + $0x18] sm:$0xf] %vm256, %v1235
  %1326 = vst.msk [vmem:[%s1318 + $0x1c] sm:$0xf] %vm256, %v1237
  %1327 = vst.msk [vmem:[%s1318 + $0x20] sm:$0xf] %vm256, %v1239
  %1328 = vst.msk [vmem:[%s1318 + $0x24] sm:$0xf] %vm256, %v1241
  %1329 = vst.msk [vmem:[%s1318 + $0x28] sm:$0xf] %vm256, %v1243
  %1330 = vst.msk [vmem:[%s1318 + $0x2c] sm:$0xf] %vm256, %v1245
  %1331 = vst.msk [vmem:[%s1318 + $0x30] sm:$0xf] %vm256, %v1247
  %1332 = vst.msk [vmem:[%s1318 + $0x34] sm:$0xf] %vm256, %v1249
  %1333 = vst.msk [vmem:[%s1318 + $0x38] sm:$0xf] %vm256, %v1251
  %1334 = vst.msk [vmem:[%s1318 + $0x3c] sm:$0xf] %vm256, %v1253
  %1335 = vst.msk [vmem:[%s1318 + $0x40] sm:$0xf] %vm256, %v1255
  %1336 = vst.msk [vmem:[%s1318 + $0x44] sm:$0xf] %vm256, %v1257
  %1337 = vst.msk [vmem:[%s1318 + $0x48] sm:$0xf] %vm256, %v1259
  %1338 = vst.msk [vmem:[%s1318 + $0x4c] sm:$0xf] %vm256, %v1261
  %1339 = vst.msk [vmem:[%s1318 + $0x50] sm:$0xf] %vm256, %v1263
  %1340 = vst.msk [vmem:[%s1318 + $0x54] sm:$0xf] %vm256, %v1265
  %1341 = vst.msk [vmem:[%s1318 + $0x58] sm:$0xf] %vm256, %v1267
  %1342 = vst.msk [vmem:[%s1318 + $0x5c] sm:$0xf] %vm256, %v1269
  %1343 = vst.msk [vmem:[%s1318 + $0x60] sm:$0xf] %vm256, %v1271
  %1344 = vst.msk [vmem:[%s1318 + $0x64] sm:$0xf] %vm256, %v1273
  %1345 = vst.msk [vmem:[%s1318 + $0x68] sm:$0xf] %vm256, %v1275
  %1346 = vst.msk [vmem:[%s1318 + $0x6c] sm:$0xf] %vm256, %v1277
  %1347 = vst.msk [vmem:[%s1318 + $0x70] sm:$0xf] %vm256, %v1279
  %1348 = vst.msk [vmem:[%s1318 + $0x74] sm:$0xf] %vm256, %v1281
  %1349 = vst.msk [vmem:[%s1318 + $0x78] sm:$0xf] %vm256, %v1283
  %1350 = vst.msk [vmem:[%s1318 + $0x7c] sm:$0xf] %vm256, %v1285
  %1351 = vrot.lane.b32.xlu0 %v224, 104
  %v1352 = vpop.permute.xlu0 %1351
  %1353 = vrot.lane.b32.xlu0 %v225, 104
  %v1354 = vpop.permute.xlu0 %1353
  %1355 = vrot.lane.b32.xlu0 %v226, 104
  %v1356 = vpop.permute.xlu0 %1355
  %1357 = vrot.lane.b32.xlu0 %v227, 104
  %v1358 = vpop.permute.xlu0 %1357
  %1359 = vrot.lane.b32.xlu0 %v228, 104
  %v1360 = vpop.permute.xlu0 %1359
  %1361 = vrot.lane.b32.xlu0 %v229, 104
  %v1362 = vpop.permute.xlu0 %1361
  %1363 = vrot.lane.b32.xlu0 %v230, 104
  %v1364 = vpop.permute.xlu0 %1363
  %1365 = vrot.lane.b32.xlu0 %v231, 104
  %v1366 = vpop.permute.xlu0 %1365
  %1367 = vrot.lane.b32.xlu0 %v232, 104
  %v1368 = vpop.permute.xlu0 %1367
  %1369 = vrot.lane.b32.xlu0 %v233, 104
  %v1370 = vpop.permute.xlu0 %1369
  %1371 = vrot.lane.b32.xlu0 %v234, 104
  %v1372 = vpop.permute.xlu0 %1371
  %1373 = vrot.lane.b32.xlu0 %v235, 104
  %v1374 = vpop.permute.xlu0 %1373
  %1375 = vrot.lane.b32.xlu0 %v236, 104
  %v1376 = vpop.permute.xlu0 %1375
  %1377 = vrot.lane.b32.xlu0 %v237, 104
  %v1378 = vpop.permute.xlu0 %1377
  %1379 = vrot.lane.b32.xlu0 %v238, 104
  %v1380 = vpop.permute.xlu0 %1379
  %1381 = vrot.lane.b32.xlu0 %v239, 104
  %v1382 = vpop.permute.xlu0 %1381
  %1383 = vrot.lane.b32.xlu0 %v240, 104
  %v1384 = vpop.permute.xlu0 %1383
  %1385 = vrot.lane.b32.xlu0 %v241, 104
  %v1386 = vpop.permute.xlu0 %1385
  %1387 = vrot.lane.b32.xlu0 %v242, 104
  %v1388 = vpop.permute.xlu0 %1387
  %1389 = vrot.lane.b32.xlu0 %v243, 104
  %v1390 = vpop.permute.xlu0 %1389
  %1391 = vrot.lane.b32.xlu0 %v244, 104
  %v1392 = vpop.permute.xlu0 %1391
  %1393 = vrot.lane.b32.xlu0 %v245, 104
  %v1394 = vpop.permute.xlu0 %1393
  %1395 = vrot.lane.b32.xlu0 %v246, 104
  %v1396 = vpop.permute.xlu0 %1395
  %1397 = vrot.lane.b32.xlu0 %v247, 104
  %v1398 = vpop.permute.xlu0 %1397
  %1399 = vrot.lane.b32.xlu0 %v248, 104
  %v1400 = vpop.permute.xlu0 %1399
  %1401 = vrot.lane.b32.xlu0 %v249, 104
  %v1402 = vpop.permute.xlu0 %1401
  %1403 = vrot.lane.b32.xlu0 %v250, 104
  %v1404 = vpop.permute.xlu0 %1403
  %1405 = vrot.lane.b32.xlu0 %v251, 104
  %v1406 = vpop.permute.xlu0 %1405
  %1407 = vrot.lane.b32.xlu0 %v252, 104
  %v1408 = vpop.permute.xlu0 %1407
  %1409 = vrot.lane.b32.xlu0 %v253, 104
  %v1410 = vpop.permute.xlu0 %1409
  %1411 = vrot.lane.b32.xlu0 %v254, 104
  %v1412 = vpop.permute.xlu0 %1411
  %1413 = vrot.lane.b32.xlu0 %v255, 104
  %v1414 = vpop.permute.xlu0 %1413
  %s1447 = scalar_lea.vmem %s3, 384
  %1448 = vst.msk [vmem:[%s1447] sm:$0xf] %vm256, %v1352
  %1449 = vst.msk [vmem:[%s1447 + $0x4] sm:$0xf] %vm256, %v1354
  %1450 = vst.msk [vmem:[%s1447 + $0x8] sm:$0xf] %vm256, %v1356
  %1451 = vst.msk [vmem:[%s1447 + $0xc] sm:$0xf] %vm256, %v1358
  %1452 = vst.msk [vmem:[%s1447 + $0x10] sm:$0xf] %vm256, %v1360
  %1453 = vst.msk [vmem:[%s1447 + $0x14] sm:$0xf] %vm256, %v1362
  %1454 = vst.msk [vmem:[%s1447 + $0x18] sm:$0xf] %vm256, %v1364
  %1455 = vst.msk [vmem:[%s1447 + $0x1c] sm:$0xf] %vm256, %v1366
  %1456 = vst.msk [vmem:[%s1447 + $0x20] sm:$0xf] %vm256, %v1368
  %1457 = vst.msk [vmem:[%s1447 + $0x24] sm:$0xf] %vm256, %v1370
  %1458 = vst.msk [vmem:[%s1447 + $0x28] sm:$0xf] %vm256, %v1372
  %1459 = vst.msk [vmem:[%s1447 + $0x2c] sm:$0xf] %vm256, %v1374
  %1460 = vst.msk [vmem:[%s1447 + $0x30] sm:$0xf] %vm256, %v1376
  %1461 = vst.msk [vmem:[%s1447 + $0x34] sm:$0xf] %vm256, %v1378
  %1462 = vst.msk [vmem:[%s1447 + $0x38] sm:$0xf] %vm256, %v1380
  %1463 = vst.msk [vmem:[%s1447 + $0x3c] sm:$0xf] %vm256, %v1382
  %1464 = vst.msk [vmem:[%s1447 + $0x40] sm:$0xf] %vm256, %v1384
  %1465 = vst.msk [vmem:[%s1447 + $0x44] sm:$0xf] %vm256, %v1386
  %1466 = vst.msk [vmem:[%s1447 + $0x48] sm:$0xf] %vm256, %v1388
  %1467 = vst.msk [vmem:[%s1447 + $0x4c] sm:$0xf] %vm256, %v1390
  %1468 = vst.msk [vmem:[%s1447 + $0x50] sm:$0xf] %vm256, %v1392
  %1469 = vst.msk [vmem:[%s1447 + $0x54] sm:$0xf] %vm256, %v1394
  %1470 = vst.msk [vmem:[%s1447 + $0x58] sm:$0xf] %vm256, %v1396
  %1471 = vst.msk [vmem:[%s1447 + $0x5c] sm:$0xf] %vm256, %v1398
  %1472 = vst.msk [vmem:[%s1447 + $0x60] sm:$0xf] %vm256, %v1400
  %1473 = vst.msk [vmem:[%s1447 + $0x64] sm:$0xf] %vm256, %v1402
  %1474 = vst.msk [vmem:[%s1447 + $0x68] sm:$0xf] %vm256, %v1404
  %1475 = vst.msk [vmem:[%s1447 + $0x6c] sm:$0xf] %vm256, %v1406
  %1476 = vst.msk [vmem:[%s1447 + $0x70] sm:$0xf] %vm256, %v1408
  %1477 = vst.msk [vmem:[%s1447 + $0x74] sm:$0xf] %vm256, %v1410
  %1478 = vst.msk [vmem:[%s1447 + $0x78] sm:$0xf] %vm256, %v1412
  %1479 = vst.msk [vmem:[%s1447 + $0x7c] sm:$0xf] %vm256, %v1414
  %1480 = vrot.lane.b32.xlu0 %v224, 72
  %v1481 = vpop.permute.xlu0 %1480
  %1482 = vrot.lane.b32.xlu0 %v225, 72
  %v1483 = vpop.permute.xlu0 %1482
  %1484 = vrot.lane.b32.xlu0 %v226, 72
  %v1485 = vpop.permute.xlu0 %1484
  %1486 = vrot.lane.b32.xlu0 %v227, 72
  %v1487 = vpop.permute.xlu0 %1486
  %1488 = vrot.lane.b32.xlu0 %v228, 72
  %v1489 = vpop.permute.xlu0 %1488
  %1490 = vrot.lane.b32.xlu0 %v229, 72
  %v1491 = vpop.permute.xlu0 %1490
  %1492 = vrot.lane.b32.xlu0 %v230, 72
  %v1493 = vpop.permute.xlu0 %1492
  %1494 = vrot.lane.b32.xlu0 %v231, 72
  %v1495 = vpop.permute.xlu0 %1494
  %1496 = vrot.lane.b32.xlu0 %v232, 72
  %v1497 = vpop.permute.xlu0 %1496
  %1498 = vrot.lane.b32.xlu0 %v233, 72
  %v1499 = vpop.permute.xlu0 %1498
  %1500 = vrot.lane.b32.xlu0 %v234, 72
  %v1501 = vpop.permute.xlu0 %1500
  %1502 = vrot.lane.b32.xlu0 %v235, 72
  %v1503 = vpop.permute.xlu0 %1502
  %1504 = vrot.lane.b32.xlu0 %v236, 72
  %v1505 = vpop.permute.xlu0 %1504
  %1506 = vrot.lane.b32.xlu0 %v237, 72
  %v1507 = vpop.permute.xlu0 %1506
  %1508 = vrot.lane.b32.xlu0 %v238, 72
  %v1509 = vpop.permute.xlu0 %1508
  %1510 = vrot.lane.b32.xlu0 %v239, 72
  %v1511 = vpop.permute.xlu0 %1510
  %1512 = vrot.lane.b32.xlu0 %v240, 72
  %v1513 = vpop.permute.xlu0 %1512
  %1514 = vrot.lane.b32.xlu0 %v241, 72
  %v1515 = vpop.permute.xlu0 %1514
  %1516 = vrot.lane.b32.xlu0 %v242, 72
  %v1517 = vpop.permute.xlu0 %1516
  %1518 = vrot.lane.b32.xlu0 %v243, 72
  %v1519 = vpop.permute.xlu0 %1518
  %1520 = vrot.lane.b32.xlu0 %v244, 72
  %v1521 = vpop.permute.xlu0 %1520
  %1522 = vrot.lane.b32.xlu0 %v245, 72
  %v1523 = vpop.permute.xlu0 %1522
  %1524 = vrot.lane.b32.xlu0 %v246, 72
  %v1525 = vpop.permute.xlu0 %1524
  %1526 = vrot.lane.b32.xlu0 %v247, 72
  %v1527 = vpop.permute.xlu0 %1526
  %1528 = vrot.lane.b32.xlu0 %v248, 72
  %v1529 = vpop.permute.xlu0 %1528
  %1530 = vrot.lane.b32.xlu0 %v249, 72
  %v1531 = vpop.permute.xlu0 %1530
  %1532 = vrot.lane.b32.xlu0 %v250, 72
  %v1533 = vpop.permute.xlu0 %1532
  %1534 = vrot.lane.b32.xlu0 %v251, 72
  %v1535 = vpop.permute.xlu0 %1534
  %1536 = vrot.lane.b32.xlu0 %v252, 72
  %v1537 = vpop.permute.xlu0 %1536
  %1538 = vrot.lane.b32.xlu0 %v253, 72
  %v1539 = vpop.permute.xlu0 %1538
  %1540 = vrot.lane.b32.xlu0 %v254, 72
  %v1541 = vpop.permute.xlu0 %1540
  %1542 = vrot.lane.b32.xlu0 %v255, 72
  %v1543 = vpop.permute.xlu0 %1542
  %s1576 = scalar_lea.vmem %s4, 384
  %1577 = vst.msk [vmem:[%s1576] sm:$0xf] %vm256, %v1481
  %1578 = vst.msk [vmem:[%s1576 + $0x4] sm:$0xf] %vm256, %v1483
  %1579 = vst.msk [vmem:[%s1576 + $0x8] sm:$0xf] %vm256, %v1485
  %1580 = vst.msk [vmem:[%s1576 + $0xc] sm:$0xf] %vm256, %v1487
  %1581 = vst.msk [vmem:[%s1576 + $0x10] sm:$0xf] %vm256, %v1489
  %1582 = vst.msk [vmem:[%s1576 + $0x14] sm:$0xf] %vm256, %v1491
  %1583 = vst.msk [vmem:[%s1576 + $0x18] sm:$0xf] %vm256, %v1493
  %1584 = vst.msk [vmem:[%s1576 + $0x1c] sm:$0xf] %vm256, %v1495
  %1585 = vst.msk [vmem:[%s1576 + $0x20] sm:$0xf] %vm256, %v1497
  %1586 = vst.msk [vmem:[%s1576 + $0x24] sm:$0xf] %vm256, %v1499
  %1587 = vst.msk [vmem:[%s1576 + $0x28] sm:$0xf] %vm256, %v1501
  %1588 = vst.msk [vmem:[%s1576 + $0x2c] sm:$0xf] %vm256, %v1503
  %1589 = vst.msk [vmem:[%s1576 + $0x30] sm:$0xf] %vm256, %v1505
  %1590 = vst.msk [vmem:[%s1576 + $0x34] sm:$0xf] %vm256, %v1507
  %1591 = vst.msk [vmem:[%s1576 + $0x38] sm:$0xf] %vm256, %v1509
  %1592 = vst.msk [vmem:[%s1576 + $0x3c] sm:$0xf] %vm256, %v1511
  %1593 = vst.msk [vmem:[%s1576 + $0x40] sm:$0xf] %vm256, %v1513
  %1594 = vst.msk [vmem:[%s1576 + $0x44] sm:$0xf] %vm256, %v1515
  %1595 = vst.msk [vmem:[%s1576 + $0x48] sm:$0xf] %vm256, %v1517
  %1596 = vst.msk [vmem:[%s1576 + $0x4c] sm:$0xf] %vm256, %v1519
  %1597 = vst.msk [vmem:[%s1576 + $0x50] sm:$0xf] %vm256, %v1521
  %1598 = vst.msk [vmem:[%s1576 + $0x54] sm:$0xf] %vm256, %v1523
  %1599 = vst.msk [vmem:[%s1576 + $0x58] sm:$0xf] %vm256, %v1525
  %1600 = vst.msk [vmem:[%s1576 + $0x5c] sm:$0xf] %vm256, %v1527
  %1601 = vst.msk [vmem:[%s1576 + $0x60] sm:$0xf] %vm256, %v1529
  %1602 = vst.msk [vmem:[%s1576 + $0x64] sm:$0xf] %vm256, %v1531
  %1603 = vst.msk [vmem:[%s1576 + $0x68] sm:$0xf] %vm256, %v1533
  %1604 = vst.msk [vmem:[%s1576 + $0x6c] sm:$0xf] %vm256, %v1535
  %1605 = vst.msk [vmem:[%s1576 + $0x70] sm:$0xf] %vm256, %v1537
  %1606 = vst.msk [vmem:[%s1576 + $0x74] sm:$0xf] %vm256, %v1539
  %1607 = vst.msk [vmem:[%s1576 + $0x78] sm:$0xf] %vm256, %v1541
  %1608 = vst.msk [vmem:[%s1576 + $0x7c] sm:$0xf] %vm256, %v1543
  %1609 = vrot.lane.b32.xlu0 %v224, 40
  %v1610 = vpop.permute.xlu0 %1609
  %1611 = vrot.lane.b32.xlu0 %v225, 40
  %v1612 = vpop.permute.xlu0 %1611
  %1613 = vrot.lane.b32.xlu0 %v226, 40
  %v1614 = vpop.permute.xlu0 %1613
  %1615 = vrot.lane.b32.xlu0 %v227, 40
  %v1616 = vpop.permute.xlu0 %1615
  %1617 = vrot.lane.b32.xlu0 %v228, 40
  %v1618 = vpop.permute.xlu0 %1617
  %1619 = vrot.lane.b32.xlu0 %v229, 40
  %v1620 = vpop.permute.xlu0 %1619
  %1621 = vrot.lane.b32.xlu0 %v230, 40
  %v1622 = vpop.permute.xlu0 %1621
  %1623 = vrot.lane.b32.xlu0 %v231, 40
  %v1624 = vpop.permute.xlu0 %1623
  %1625 = vrot.lane.b32.xlu0 %v232, 40
  %v1626 = vpop.permute.xlu0 %1625
  %1627 = vrot.lane.b32.xlu0 %v233, 40
  %v1628 = vpop.permute.xlu0 %1627
  %1629 = vrot.lane.b32.xlu0 %v234, 40
  %v1630 = vpop.permute.xlu0 %1629
  %1631 = vrot.lane.b32.xlu0 %v235, 40
  %v1632 = vpop.permute.xlu0 %1631
  %1633 = vrot.lane.b32.xlu0 %v236, 40
  %v1634 = vpop.permute.xlu0 %1633
  %1635 = vrot.lane.b32.xlu0 %v237, 40
  %v1636 = vpop.permute.xlu0 %1635
  %1637 = vrot.lane.b32.xlu0 %v238, 40
  %v1638 = vpop.permute.xlu0 %1637
  %1639 = vrot.lane.b32.xlu0 %v239, 40
  %v1640 = vpop.permute.xlu0 %1639
  %1641 = vrot.lane.b32.xlu0 %v240, 40
  %v1642 = vpop.permute.xlu0 %1641
  %1643 = vrot.lane.b32.xlu0 %v241, 40
  %v1644 = vpop.permute.xlu0 %1643
  %1645 = vrot.lane.b32.xlu0 %v242, 40
  %v1646 = vpop.permute.xlu0 %1645
  %1647 = vrot.lane.b32.xlu0 %v243, 40
  %v1648 = vpop.permute.xlu0 %1647
  %1649 = vrot.lane.b32.xlu0 %v244, 40
  %v1650 = vpop.permute.xlu0 %1649
  %1651 = vrot.lane.b32.xlu0 %v245, 40
  %v1652 = vpop.permute.xlu0 %1651
  %1653 = vrot.lane.b32.xlu0 %v246, 40
  %v1654 = vpop.permute.xlu0 %1653
  %1655 = vrot.lane.b32.xlu0 %v247, 40
  %v1656 = vpop.permute.xlu0 %1655
  %1657 = vrot.lane.b32.xlu0 %v248, 40
  %v1658 = vpop.permute.xlu0 %1657
  %1659 = vrot.lane.b32.xlu0 %v249, 40
  %v1660 = vpop.permute.xlu0 %1659
  %1661 = vrot.lane.b32.xlu0 %v250, 40
  %v1662 = vpop.permute.xlu0 %1661
  %1663 = vrot.lane.b32.xlu0 %v251, 40
  %v1664 = vpop.permute.xlu0 %1663
  %1665 = vrot.lane.b32.xlu0 %v252, 40
  %v1666 = vpop.permute.xlu0 %1665
  %1667 = vrot.lane.b32.xlu0 %v253, 40
  %v1668 = vpop.permute.xlu0 %1667
  %1669 = vrot.lane.b32.xlu0 %v254, 40
  %v1670 = vpop.permute.xlu0 %1669
  %1671 = vrot.lane.b32.xlu0 %v255, 40
  %v1672 = vpop.permute.xlu0 %1671
  %s1705 = scalar_lea.vmem %s5, 384
  %1706 = vst.msk [vmem:[%s1705] sm:$0xf] %vm256, %v1610
  %1707 = vst.msk [vmem:[%s1705 + $0x4] sm:$0xf] %vm256, %v1612
  %1708 = vst.msk [vmem:[%s1705 + $0x8] sm:$0xf] %vm256, %v1614
  %1709 = vst.msk [vmem:[%s1705 + $0xc] sm:$0xf] %vm256, %v1616
  %1710 = vst.msk [vmem:[%s1705 + $0x10] sm:$0xf] %vm256, %v1618
  %1711 = vst.msk [vmem:[%s1705 + $0x14] sm:$0xf] %vm256, %v1620
  %1712 = vst.msk [vmem:[%s1705 + $0x18] sm:$0xf] %vm256, %v1622
  %1713 = vst.msk [vmem:[%s1705 + $0x1c] sm:$0xf] %vm256, %v1624
  %1714 = vst.msk [vmem:[%s1705 + $0x20] sm:$0xf] %vm256, %v1626
  %1715 = vst.msk [vmem:[%s1705 + $0x24] sm:$0xf] %vm256, %v1628
  %1716 = vst.msk [vmem:[%s1705 + $0x28] sm:$0xf] %vm256, %v1630
  %1717 = vst.msk [vmem:[%s1705 + $0x2c] sm:$0xf] %vm256, %v1632
  %1718 = vst.msk [vmem:[%s1705 + $0x30] sm:$0xf] %vm256, %v1634
  %1719 = vst.msk [vmem:[%s1705 + $0x34] sm:$0xf] %vm256, %v1636
  %1720 = vst.msk [vmem:[%s1705 + $0x38] sm:$0xf] %vm256, %v1638
  %1721 = vst.msk [vmem:[%s1705 + $0x3c] sm:$0xf] %vm256, %v1640
  %1722 = vst.msk [vmem:[%s1705 + $0x40] sm:$0xf] %vm256, %v1642
  %1723 = vst.msk [vmem:[%s1705 + $0x44] sm:$0xf] %vm256, %v1644
  %1724 = vst.msk [vmem:[%s1705 + $0x48] sm:$0xf] %vm256, %v1646
  %1725 = vst.msk [vmem:[%s1705 + $0x4c] sm:$0xf] %vm256, %v1648
  %1726 = vst.msk [vmem:[%s1705 + $0x50] sm:$0xf] %vm256, %v1650
  %1727 = vst.msk [vmem:[%s1705 + $0x54] sm:$0xf] %vm256, %v1652
  %1728 = vst.msk [vmem:[%s1705 + $0x58] sm:$0xf] %vm256, %v1654
  %1729 = vst.msk [vmem:[%s1705 + $0x5c] sm:$0xf] %vm256, %v1656
  %1730 = vst.msk [vmem:[%s1705 + $0x60] sm:$0xf] %vm256, %v1658
  %1731 = vst.msk [vmem:[%s1705 + $0x64] sm:$0xf] %vm256, %v1660
  %1732 = vst.msk [vmem:[%s1705 + $0x68] sm:$0xf] %vm256, %v1662
  %1733 = vst.msk [vmem:[%s1705 + $0x6c] sm:$0xf] %vm256, %v1664
  %1734 = vst.msk [vmem:[%s1705 + $0x70] sm:$0xf] %vm256, %v1666
  %1735 = vst.msk [vmem:[%s1705 + $0x74] sm:$0xf] %vm256, %v1668
  %1736 = vst.msk [vmem:[%s1705 + $0x78] sm:$0xf] %vm256, %v1670
  %1737 = vst.msk [vmem:[%s1705 + $0x7c] sm:$0xf] %vm256, %v1672
  // Predicated region
  $region14: #{tpu_custom_call.1} parent=0 // pred_check
    _
  $region15: #{tpu_custom_call.1} parent=0 // pred_check_branch
    %1739 = sbr.rel (0) target = $region17
  $region16: #{tpu_custom_call.1} parent=0 // pred_region
    _
  $region17: #{tpu_custom_call.1} parent=0 // pred_fallthru
    _
  // Predicated region
  $region18: #{tpu_custom_call.1} parent=0 // pred_check
    _
  $region19: #{tpu_custom_call.1} parent=0 // pred_check_branch
    %1741 = sbr.rel (0) target = $region21
  $region20: #{tpu_custom_call.1} parent=0 // pred_region
    _
  $region21: #{tpu_custom_call.1} parent=0 // pred_fallthru
    _
  // Predicated region
  $region22: #{tpu_custom_call.1} parent=0 // pred_check
    _
  $region23: #{tpu_custom_call.1} parent=0 // pred_check_branch
    %1743 = sbr.rel (0) target = $region25
  $region24: #{tpu_custom_call.1} parent=0 // pred_region
    _
  $region25: #{tpu_custom_call.1} parent=0 // pred_fallthru
    _
  // Predicated region
  $region26: #{tpu_custom_call.1} parent=0 // pred_check
    _
  $region27: #{tpu_custom_call.1} parent=0 // pred_check_branch
    %1745 = sbr.rel (0) target = $region29
  $region28: #{tpu_custom_call.1} parent=0 // pred_region
    _
  $region29: #{tpu_custom_call.1} parent=0 // pred_fallthru
    _
  // Predicated region
  $region30: #{tpu_custom_call.1} parent=0 // pred_check
    _
  $region31: #{tpu_custom_call.1} parent=0 // pred_check_branch
    %1747 = sbr.rel (0) target = $region33
  $region32: #{tpu_custom_call.1} parent=0 // pred_region
    _
  $region33: #{tpu_custom_call.1} parent=0 // pred_fallthru
    _
  // Predicated region
  $region34: #{tpu_custom_call.1} parent=0 // pred_check
    _
  $region35: #{tpu_custom_call.1} parent=0 // pred_check_branch
    %1749 = sbr.rel (0) target = $region37
  $region36: #{tpu_custom_call.1} parent=0 // pred_region
    _
  $region37: #{tpu_custom_call.1} parent=0 // pred_fallthru
    _

</llo_original>
